<compile_context>
chip_gen: v7x
topology: tpu7x:2x2x1
jax: 0.10.0
libtpu: 0.0.40
codegen_flags: <defaults>
</compile_context>

<pallas_src>
import functools

import jax
import jax.numpy as jnp
from jax.experimental import pallas as pl
from jax.experimental.pallas import tpu as pltpu

NEG_SLOPE = 0.2                   # GATConv negative_slope
BN_EPS = 1e-5                     # nn.BatchNorm1d default eps
MASK_NEG = 1e30                   # additive bias magnitude for non-edges
VMEM_LIMIT = 32 * 1024 * 1024     # scoped-VMEM cap (leaves headroom on v7x's 64 MiB)

MM_TILE = 512                     # projection row tile (mem-bound -> bigger is better)
DST_TILE = 128                    # attention dst-row tile


def _tile(dim, pref):
    # Largest "native" tile: pref when it divides dim, otherwise one full block.
    # TODO(synk): for real (non-128-divisible) OGB node counts, pad N to a multiple
    # of 128 (mask rows/cols padded with -1e30) and use pl.cdiv grids instead.
    return pref if dim % pref == 0 else dim


# ----------------------------------------------------------------- projection
#
# For each output head g of the augmented weight (2H heads: [fc | skip-linear]):
#   proj[g] = x_flat @ w_aug[g]            x_flat: (N, K), w_aug[g]: (K, d+2)
# fc heads carry 2 extra columns = precomputed attention scores (el, er);
# linear heads carry 2 zero columns (unused) so the block shape stays uniform.

def _proj_kernel(x_ref, w_ref, o_ref):
    o_ref[0] = jnp.dot(x_ref[...], w_ref[0],
                       preferred_element_type=jnp.float32).astype(o_ref.dtype)


def fused_projection(x_flat, w_aug):
    """(N, K) bf16 x (2H, K, d+2) bf16 -> head-major (2H, N, d+2) bf16."""
    n, k = x_flat.shape
    g, _, dw = w_aug.shape
    tm = _tile(n, MM_TILE)
    return pl.pallas_call(
        _proj_kernel,
        out_shape=jax.ShapeDtypeStruct((g, n, dw), jnp.bfloat16),
        grid=(n // tm, g),                        # head axis innermost: x block reused
        in_specs=[pl.BlockSpec((tm, k), lambda i, gg: (i, 0)),
                  pl.BlockSpec((1, k, dw), lambda i, gg: (gg, 0, 0))],
        out_specs=pl.BlockSpec((1, tm, dw), lambda i, gg: (gg, i, 0)),
        compiler_params=pltpu.CompilerParams(
            dimension_semantics=("parallel", "arbitrary"),
            vmem_limit_bytes=VMEM_LIMIT),
    )(x_flat, w_aug)


# ------------------------------------------------------------------ attention
#
# proj head layout per fc head h: [:, :d] = ft_h, [:, d] = el_h, [:, d+1] = er_h.
# The dst tile (rows, er) is sliced in-kernel from the resident full ft block.
# TODO(synk): for very large N (esp. v7x 64 MiB VMEM) add a src-tile grid axis with
# an online-softmax accumulator; here the full src dimension is held per step.

def _attn_probs(ft_ref, bias_ref, td, d_out, *, exact):
    start = pl.multiple_of(pl.program_id(0) * td, td)
    ftall = ft_ref[0]                                          # (N, d+2) bf16
    ft_dst = ft_ref[0, pl.ds(start, td), :]                    # (td, d+2) bf16
    el = ftall[:, d_out:d_out + 1].astype(jnp.float32)         # (N, 1)  src scores
    er = ft_dst[:, d_out + 1:d_out + 2].astype(jnp.float32)    # (td, 1) dst scores
    e = er + jnp.transpose(el)                                 # e[v, u] = er[v] + el[u]
    e = jnp.where(e > 0, e, NEG_SLOPE * e)                     # LeakyReLU
    e = e + bias_ref[...].astype(jnp.float32)                  # additive edge mask
    m = jnp.max(e, axis=-1, keepdims=True)                     # edge_softmax over src
    p = jnp.exp(e - m)
    denom = jnp.sum(p, axis=-1, keepdims=True)
    if exact:
        a = p / denom                                          # returned `att`: exact
    else:
        a = p * pl.reciprocal(denom, approx=True)
    return a, ftall                                            # a: (td, N) f32


def _gat_hidden_kernel(ft_ref, lin_ref, bias_ref, out_ref):
    # out[h, v, :] = (sum_u a[v,u] * ft[u,:]) + skip_linear[h, v, :]
    d_out = out_ref.shape[-1]
    td = out_ref.shape[1]
    a, ftall = _attn_probs(ft_ref, bias_ref, td, d_out, exact=False)
    rst = jnp.dot(a.astype(jnp.bfloat16), ftall,
                  preferred_element_type=jnp.float32)          # (td, d+2) MXU
    lin = lin_ref[0]
    out_ref[0] = rst[:, :d_out] + lin[:, :d_out].astype(jnp.float32)


def _gat_final_kernel(ft_ref, lin_ref, bias_ref, blast_ref, out_ref, att_ref,
                      *, inv_heads):
    # out[v, :] = mean_h(conv + linear)[v, :] + bias_last ; dense att returned.
    d_out = out_ref.shape[-1]
    td = out_ref.shape[0]
    h = pl.program_id(1)
    a, ftall = _attn_probs(ft_ref, bias_ref, td, d_out, exact=True)
    att_ref[0] = a
    rst = jnp.dot(a.astype(jnp.bfloat16), ftall,
                  preferred_element_type=jnp.float32)
    lin = lin_ref[0]
    contrib = rst[:, :d_out] + lin[:, :d_out].astype(jnp.float32)

    @pl.when(h == 0)
    def _():
        out_ref[...] = jnp.zeros_like(out_ref)

    out_ref[...] += contrib                                    # raw head sum

    @pl.when(h == pl.num_programs(1) - 1)
    def _():
        out_ref[...] = out_ref[...] * inv_heads + blast_ref[...]   # mean + bias_last


def gat_attention_hidden(proj, mask_bias, *, num_heads):
    g, n, dw = proj.shape
    hh, d = num_heads, dw - 2
    td = _tile(n, DST_TILE)
    return pl.pallas_call(
        _gat_hidden_kernel,
        out_shape=jax.ShapeDtypeStruct((hh, n, d), jnp.float32),
        grid=(n // td, hh),                       # head inner: mask block fetched once/tile
        in_specs=[
            pl.BlockSpec((1, n, dw), lambda t, h: (h, 0, 0)),        # ft + scores (all src)
            pl.BlockSpec((1, td, dw), lambda t, h: (hh + h, t, 0)),  # skip linear, dst tile
            pl.BlockSpec((td, n), lambda t, h: (t, 0)),              # additive edge mask
        ],
        out_specs=pl.BlockSpec((1, td, d), lambda t, h: (h, t, 0)),
        compiler_params=pltpu.CompilerParams(
            dimension_semantics=("parallel", "arbitrary"),
            vmem_limit_bytes=VMEM_LIMIT),
    )(proj, proj, mask_bias)


def gat_attention_final(proj, mask_bias, bias_last, *, num_heads):
    g, n, dw = proj.shape
    hh, c = num_heads, dw - 2
    td = _tile(n, DST_TILE)
    kern = functools.partial(_gat_final_kernel, inv_heads=1.0 / hh)
    return pl.pallas_call(
        kern,
        out_shape=(jax.ShapeDtypeStruct((n, c), jnp.float32),
                   jax.ShapeDtypeStruct((hh, n, n), jnp.float32)),
        grid=(n // td, hh),                       # heads innermost -> mean accumulation
        in_specs=[
            pl.BlockSpec((1, n, dw), lambda t, h: (h, 0, 0)),
            pl.BlockSpec((1, td, dw), lambda t, h: (hh + h, t, 0)),
            pl.BlockSpec((td, n), lambda t, h: (t, 0)),
            pl.BlockSpec((1, c), lambda t, h: (0, 0)),               # bias_last
        ],
        out_specs=(pl.BlockSpec((td, c), lambda t, h: (t, 0)),
                   pl.BlockSpec((1, td, n), lambda t, h: (h, t, 0))),
        compiler_params=pltpu.CompilerParams(
            dimension_semantics=("parallel", "arbitrary"),
            vmem_limit_bytes=VMEM_LIMIT),
    )(proj, proj, mask_bias, bias_last)


# ------------------------------------------------- batchnorm + relu + flatten

def _bn_relu_flatten_kernel(x_ref, o_ref):
    # BatchNorm1d (training batch stats, gamma=1, beta=0) per (head, dim) channel,
    # ReLU, then head-major -> node-major flatten (static per-head lane concat) so
    # the next layer's projection reads (N, H*d) directly.
    x = x_ref[...]                                                 # (H, N, d) f32
    mu = jnp.mean(x, axis=1, keepdims=True)
    var = jnp.mean((x - mu) * (x - mu), axis=1, keepdims=True)     # biased variance
    y = jnp.maximum((x - mu) * jax.lax.rsqrt(var + BN_EPS), 0.0)
    hh = x.shape[0]
    o_ref[...] = jnp.concatenate([y[h] for h in range(hh)], axis=-1).astype(o_ref.dtype)


def bn_relu_flatten(x_hnd):
    # TODO(synk): single full-array block (stats need all nodes); for very large N
    # split into a two-pass (stats, then normalize) tiled pair of kernels.
    hh, n, d = x_hnd.shape
    return pl.pallas_call(
        _bn_relu_flatten_kernel,
        out_shape=jax.ShapeDtypeStruct((n, hh * d), jnp.bfloat16),
        grid=(1,),
        in_specs=[pl.BlockSpec((hh, n, d), lambda i: (0, 0, 0))],
        out_specs=pl.BlockSpec((n, hh * d), lambda i: (0, 0)),
        compiler_params=pltpu.CompilerParams(vmem_limit_bytes=VMEM_LIMIT),
    )(x_hnd)


# ------------------------------------------------------------ model wrapper

def init_params(key, in_feats, n_hidden, n_classes, n_layers, n_heads):
    gain = 2.0 ** 0.5            # nn.init.calculate_gain('relu')
    layers = []
    for i in range(n_layers):
        in_hidden = n_heads * n_hidden if i > 0 else in_feats
        out_hidden = n_hidden if i < n_layers - 1 else n_classes
        key, k1, k2, k3, k4 = jax.random.split(key, 5)
        # GATConv.fc (xavier-normal, bias free), stored (in, out) for x @ W.
        std_fc = gain * (2.0 / (in_hidden + out_hidden * n_heads)) ** 0.5
        fc_w = std_fc * jax.random.normal(
            k1, (in_hidden, n_heads * out_hidden), jnp.float32)
        # parallel skip linear (bias free).
        std_lin = 1.0 / (in_hidden ** 0.5)
        lin_w = std_lin * jax.random.normal(
            k4, (in_hidden, n_heads * out_hidden), jnp.float32)
        # attention vectors (xavier-normal-like).
        std_a = gain * (2.0 / (n_heads * out_hidden + out_hidden)) ** 0.5
        attn_l = std_a * jax.random.normal(k2, (n_heads, out_hidden), jnp.float32)
        attn_r = std_a * jax.random.normal(k3, (n_heads, out_hidden), jnp.float32)
        # Augmented per-head weight (2H, K, d+2):
        #   fc head h     -> [W_fc_h | W_fc_h @ attn_l_h | W_fc_h @ attn_r_h]
        #   linear head h -> [W_lin_h | 0 | 0]
        blocks = []
        for h in range(n_heads):
            wf = fc_w[:, h * out_hidden:(h + 1) * out_hidden]
            wel = wf @ attn_l[h][:, None]
            wer = wf @ attn_r[h][:, None]
            blocks.append(jnp.concatenate([wf, wel, wer], axis=1))
        for h in range(n_heads):
            wl = lin_w[:, h * out_hidden:(h + 1) * out_hidden]
            blocks.append(jnp.concatenate(
                [wl, jnp.zeros((in_hidden, 2), jnp.float32)], axis=1))
        w_aug = jnp.stack(blocks, axis=0).astype(jnp.bfloat16)   # (2H, K, d+2)
        layers.append(dict(w_aug=w_aug))
    bias_last = jnp.zeros((1, n_classes), jnp.float32)           # Bias: zero init
    return dict(layers=layers, bias_last=bias_last)


def ogb_gat_forward(params, feat, mask_bias, *, n_heads, n_hidden, n_classes, n_layers):
    """Returns (h, att) like ogb_GAT.forward.

    h: (N, n_classes) f32.  att: last GATConv's attention coefficients, dense
    (H, N_dst, N_src) (the torch module returns the same values per edge).
    dropout0 / dropout / feat_drop / attn_drop all have p = 0.0 -> identities."""
    out = None
    att = None
    x = feat.astype(jnp.bfloat16)                       # node-major (N, K)
    for i in range(n_layers):
        p = params["layers"][i]
        proj = fused_projection(x, p["w_aug"])          # (2H, N, d+2) bf16, head-major
        if i < n_layers - 1:
            conv_lin = gat_attention_hidden(
                proj, mask_bias, num_heads=n_heads)     # (H, N, d) f32
            x = bn_relu_flatten(conv_lin)               # (N, H*d) bf16, node-major
        else:
            out, att = gat_attention_final(
                proj, mask_bias, params["bias_last"],
                num_heads=n_heads)                      # (N, C) f32, (H, N, N) f32
    return out, att


# ---------------------------------------------------------------------- main

if __name__ == "__main__":
    N = 16           # nodes
    in_feats = 16
    n_hidden = 8
    n_classes = 4
    n_layers = 2
    n_heads = 4
    # TODO(synk): per-head widths of 8/4 leave MXU/VPU lanes mostly idle; real configs
    # should use head widths that are multiples of 128 for lane-dense stores.

    key = jax.random.PRNGKey(0)
    kf, kp = jax.random.split(key)
    feat = jax.random.normal(kf, (N, in_feats), jnp.float32)

    # Deterministic graph: self-loops + ring + skip-3 edges (no zero in-degree;
    # a zero-in-degree node would get a uniform row instead of DGL's error).
    idx = jnp.arange(N)
    adj = jnp.zeros((N, N), jnp.float32)         # adj[u, v] = 1  <=>  edge u -> v
    adj = adj.at[idx, idx].set(1.0)
    adj = adj.at[idx, (idx + 1) % N].set(1.0)
    adj = adj.at[idx, (idx + 3) % N].set(1.0)
    # Additive attention bias in (dst, src) orientation, built once for all layers.
    mask_bias = ((adj.T - 1.0) * MASK_NEG).astype(jnp.bfloat16)

    params = init_params(kp, in_feats, n_hidden, n_classes, n_layers, n_heads)

    fwd = jax.jit(functools.partial(
        ogb_gat_forward, n_heads=n_heads, n_hidden=n_hidden,
        n_classes=n_classes, n_layers=n_layers))

    # TODO(synk): torch training-mode dropout RNG is not reproduced (all p = 0.0 here);
    # BatchNorm uses per-batch statistics with gamma=1 / beta=0 (fresh module).
    out, att = fwd(params, feat, mask_bias)
    jax.block_until_ready((out, att))

    assert out.shape == (N, n_classes)
    assert att.shape == (n_heads, N, N)
    assert bool(jnp.all(jnp.isfinite(out)))
    # attention rows (incoming-edge softmax) must sum to ~1 for every dst node/head.
    row_sums = jnp.sum(att, axis=-1)
    assert bool(jnp.all(jnp.abs(row_sums - 1.0) < 1e-3))
    print("KERNEL_OK")
</pallas_src>

<mosaic_0001>
module attributes {stable_mosaic.version = 11 : i64} {
  func.func @_proj_kernel(%arg0: i32, %arg1: i32, %arg2: memref<16x16xbf16, #tpu.memory_space<vmem>>, %arg3: memref<1x16x10xbf16, #tpu.memory_space<vmem>>, %arg4: memref<1x16x10xbf16, #tpu.memory_space<vmem>>) attributes {dimension_semantics = [#tpu.dimension_semantics<parallel>, #tpu.dimension_semantics<arbitrary>], iteration_bounds = array<i64: 1, 8>, scalar_prefetch = 0 : i64, scratch_operands = 0 : i64, tpu.core_type = #tpu.core_type<tc>, window_params = [{transform_indices = @transform_0, window_bounds = array<i64: 16, 16>}, {transform_indices = @transform_1, window_bounds = array<i64: 1, 16, 10>}, {transform_indices = @transform_2, window_bounds = array<i64: 1, 16, 10>}]} {
    %c0 = arith.constant 0 : index
    %c0_0 = arith.constant 0 : index
    %0 = vector.load %arg2[%c0, %c0_0] : memref<16x16xbf16, #tpu.memory_space<vmem>>, vector<16x16xbf16>
    %c0_1 = arith.constant 0 : index
    %c0_2 = arith.constant 0 : index
    %c0_3 = arith.constant 0 : index
    %1 = vector.load %arg3[%c0_1, %c0_2, %c0_3] : memref<1x16x10xbf16, #tpu.memory_space<vmem>>, vector<1x16x10xbf16>
    %2 = vector.shape_cast %1 : vector<1x16x10xbf16> to vector<16x10xbf16>
    %cst = arith.constant dense<0.000000e+00> : vector<16x10xf32>
    %3 = tpu.matmul %0, %2, %cst {dimension_numbers = #tpu.dot_dimension_numbers<[1], [0], [0], [1], [0, 0, 1, 1], [], []>} : vector<16x16xbf16>, vector<16x10xbf16>, vector<16x10xf32> -> vector<16x10xf32>
    %4 = arith.truncf %3 : vector<16x10xf32> to vector<16x10xbf16>
    %c0_4 = arith.constant 0 : index
    %c0_5 = arith.constant 0 : index
    %c0_6 = arith.constant 0 : index
    %5 = vector.load %arg4[%c0_4, %c0_5, %c0_6] : memref<1x16x10xbf16, #tpu.memory_space<vmem>>, vector<1x16x10xbf16>
    %6 = vector.shape_cast %5 : vector<1x16x10xbf16> to vector<16x10xbf16>
    %7 = vector.shape_cast %4 : vector<16x10xbf16> to vector<1x16x10xbf16>
    tpu.vector_store %arg4[%c0_4, %c0_5, %c0_6], %7 {strides = array<i32>} : memref<1x16x10xbf16, #tpu.memory_space<vmem>>, vector<1x16x10xbf16>,
    return
  }
  func.func @transform_0(%arg0: i32, %arg1: i32) -> (i32, i32) {
    %c0_i32 = arith.constant 0 : i32
    %c0_i32_0 = arith.constant 0 : i32
    return %arg0, %c0_i32 : i32, i32
  }
  func.func @transform_1(%arg0: i32, %arg1: i32) -> (i32, i32, i32) {
    %c0_i32 = arith.constant 0 : i32
    %c0_i32_0 = arith.constant 0 : i32
    %c0_i32_1 = arith.constant 0 : i32
    return %arg1, %c0_i32, %c0_i32_0 : i32, i32, i32
  }
  func.func @transform_2(%arg0: i32, %arg1: i32) -> (i32, i32, i32) {
    %c0_i32 = arith.constant 0 : i32
    %c0_i32_0 = arith.constant 0 : i32
    return %arg1, %arg0, %c0_i32 : i32, i32, i32
  }
}

module attributes {stable_mosaic.version = 11 : i64} {
  func.func @_gat_hidden_kernel(%arg0: i32, %arg1: i32, %arg2: memref<1x16x10xbf16, #tpu.memory_space<vmem>>, %arg3: memref<1x16x10xbf16, #tpu.memory_space<vmem>>, %arg4: memref<16x16xbf16, #tpu.memory_space<vmem>>, %arg5: memref<1x16x8xf32, #tpu.memory_space<vmem>>) attributes {dimension_semantics = [#tpu.dimension_semantics<parallel>, #tpu.dimension_semantics<arbitrary>], iteration_bounds = array<i64: 1, 4>, scalar_prefetch = 0 : i64, scratch_operands = 0 : i64, tpu.core_type = #tpu.core_type<tc>, window_params = [{transform_indices = @transform_0, window_bounds = array<i64: 1, 16, 10>}, {transform_indices = @transform_1, window_bounds = array<i64: 1, 16, 10>}, {transform_indices = @transform_2, window_bounds = array<i64: 16, 16>}, {transform_indices = @transform_3, window_bounds = array<i64: 1, 16, 8>}]} {
    %c16_i32 = arith.constant 16 : i32
    %0 = arith.muli %arg0, %c16_i32 : i32
    %1 = tpu.assume_multiple %0, 16 : i32
    %c0 = arith.constant 0 : index
    %c0_0 = arith.constant 0 : index
    %c0_1 = arith.constant 0 : index
    %2 = vector.load %arg2[%c0, %c0_0, %c0_1] : memref<1x16x10xbf16, #tpu.memory_space<vmem>>, vector<1x16x10xbf16>
    %3 = vector.shape_cast %2 : vector<1x16x10xbf16> to vector<16x10xbf16>
    %c0_2 = arith.constant 0 : index
    %4 = arith.index_cast %1 : i32 to index
    %c0_3 = arith.constant 0 : index
    %5 = vector.load %arg2[%c0_2, %4, %c0_3] : memref<1x16x10xbf16, #tpu.memory_space<vmem>>, vector<1x16x10xbf16>
    %6 = vector.shape_cast %5 : vector<1x16x10xbf16> to vector<16x10xbf16>
    %7 = vector.extract_strided_slice %3 {offsets = [0, 8], sizes = [16, 1], strides = [1, 1]} : vector<16x10xbf16> to vector<16x1xbf16>
    %8 = arith.extf %7 : vector<16x1xbf16> to vector<16x1xf32>
    %9 = vector.extract_strided_slice %6 {offsets = [0, 9], sizes = [16, 1], strides = [1, 1]} : vector<16x10xbf16> to vector<16x1xbf16>
    %10 = arith.extf %9 : vector<16x1xbf16> to vector<16x1xf32>
    %11 = tpu.transpose %8, [1, 0] : vector<16x1xf32> -> vector<1x16xf32>
    %12 = vector.broadcast %10 : vector<16x1xf32> to vector<16x16xf32>
    %13 = vector.broadcast %11 : vector<1x16xf32> to vector<16x16xf32>
    %14 = arith.addf %12, %13 : vector<16x16xf32>
    %cst = arith.constant 0.000000e+00 : f32
    %15 = vector.broadcast %cst : f32 to vector<16x16xf32>
    %16 = arith.cmpf ogt, %14, %15 : vector<16x16xf32>
    %cst_4 = arith.constant 2.000000e-01 : f32
    %17 = vector.broadcast %cst_4 : f32 to vector<16x16xf32>
    %18 = arith.mulf %17, %14 : vector<16x16xf32>
    %19 = arith.select %16, %14, %18 : vector<16x16xi1>, vector<16x16xf32>
    %c0_5 = arith.constant 0 : index
    %c0_6 = arith.constant 0 : index
    %20 = vector.load %arg4[%c0_5, %c0_6] : memref<16x16xbf16, #tpu.memory_space<vmem>>, vector<16x16xbf16>
    %21 = arith.extf %20 : vector<16x16xbf16> to vector<16x16xf32>
    %22 = arith.addf %19, %21 : vector<16x16xf32>
    %cst_7 = arith.constant dense<0xFF800000> : vector<16xf32>
    %23 = vector.multi_reduction <maximumf>, %22, %cst_7 [1] : vector<16x16xf32> to vector<16xf32>
    %24 = vector.shape_cast %23 : vector<16xf32> to vector<16x1xf32>
    %25 = vector.broadcast %24 : vector<16x1xf32> to vector<16x16xf32>
    %26 = arith.subf %22, %25 : vector<16x16xf32>
    %27 = math.exp %26 : vector<16x16xf32>
    %cst_8 = arith.constant dense<0.000000e+00> : vector<16xf32>
    %28 = vector.multi_reduction <add>, %27, %cst_8 [1] : vector<16x16xf32> to vector<16xf32>
    %29 = vector.shape_cast %28 : vector<16xf32> to vector<16x1xf32>
    %30 = tpu.reciprocal %29 {approx = true} : vector<16x1xf32> -> vector<16x1xf32>
    %31 = vector.broadcast %30 : vector<16x1xf32> to vector<16x16xf32>
    %32 = arith.mulf %27, %31 : vector<16x16xf32>
    %33 = arith.truncf %32 : vector<16x16xf32> to vector<16x16xbf16>
    %cst_9 = arith.constant dense<0.000000e+00> : vector<16x10xf32>
    %34 = tpu.matmul %33, %3, %cst_9 {dimension_numbers = #tpu.dot_dimension_numbers<[1], [0], [0], [1], [0, 0, 1, 1], [], []>} : vector<16x16xbf16>, vector<16x10xbf16>, vector<16x10xf32> -> vector<16x10xf32>
    %c0_10 = arith.constant 0 : index
    %c0_11 = arith.constant 0 : index
    %c0_12 = arith.constant 0 : index
    %35 = vector.load %arg3[%c0_10, %c0_11, %c0_12] : memref<1x16x10xbf16, #tpu.memory_space<vmem>>, vector<1x16x10xbf16>
    %36 = vector.shape_cast %35 : vector<1x16x10xbf16> to vector<16x10xbf16>
    %37 = vector.extract_strided_slice %34 {offsets = [0, 0], sizes = [16, 8], strides = [1, 1]} : vector<16x10xf32> to vector<16x8xf32>
    %38 = vector.extract_strided_slice %36 {offsets = [0, 0], sizes = [16, 8], strides = [1, 1]} : vector<16x10xbf16> to vector<16x8xbf16>
    %39 = arith.extf %38 : vector<16x8xbf16> to vector<16x8xf32>
    %40 = arith.addf %37, %39 : vector<16x8xf32>
    %c0_13 = arith.constant 0 : index
    %c0_14 = arith.constant 0 : index
    %c0_15 = arith.constant 0 : index
    %41 = vector.load %arg5[%c0_13, %c0_14, %c0_15] : memref<1x16x8xf32, #tpu.memory_space<vmem>>, vector<1x16x8xf32>
    %42 = vector.shape_cast %41 : vector<1x16x8xf32> to vector<16x8xf32>
    %43 = vector.shape_cast %40 : vector<16x8xf32> to vector<1x16x8xf32>
    tpu.vector_store %arg5[%c0_13, %c0_14, %c0_15], %43 {strides = array<i32>} : memref<1x16x8xf32, #tpu.memory_space<vmem>>, vector<1x16x8xf32>,
    return
  }
  func.func @transform_0(%arg0: i32, %arg1: i32) -> (i32, i32, i32) {
    %c0_i32 = arith.constant 0 : i32
    %c0_i32_0 = arith.constant 0 : i32
    %c0_i32_1 = arith.constant 0 : i32
    return %arg1, %c0_i32, %c0_i32_0 : i32, i32, i32
  }
  func.func @transform_1(%arg0: i32, %arg1: i32) -> (i32, i32, i32) {
    %c4_i32 = arith.constant 4 : i32
    %0 = arith.addi %c4_i32, %arg1 : i32
    %c0_i32 = arith.constant 0 : i32
    %c0_i32_0 = arith.constant 0 : i32
    return %0, %arg0, %c0_i32 : i32, i32, i32
  }
  func.func @transform_2(%arg0: i32, %arg1: i32) -> (i32, i32) {
    %c0_i32 = arith.constant 0 : i32
    %c0_i32_0 = arith.constant 0 : i32
    return %arg0, %c0_i32 : i32, i32
  }
  func.func @transform_3(%arg0: i32, %arg1: i32) -> (i32, i32, i32) {
    %c0_i32 = arith.constant 0 : i32
    %c0_i32_0 = arith.constant 0 : i32
    return %arg1, %arg0, %c0_i32 : i32, i32, i32
  }
}

module attributes {stable_mosaic.version = 11 : i64} {
  func.func @_bn_relu_flatten_kernel(%arg0: i32, %arg1: memref<4x16x8xf32, #tpu.memory_space<vmem>>, %arg2: memref<16x32xbf16, #tpu.memory_space<vmem>>) attributes {dimension_semantics = [#tpu.dimension_semantics<arbitrary>], iteration_bounds = array<i64: 1>, scalar_prefetch = 0 : i64, scratch_operands = 0 : i64, tpu.core_type = #tpu.core_type<tc>, window_params = [{pipeline_mode = #tpu.pipeline_mode<synchronous>, transform_indices = @transform_0, window_bounds = array<i64: 4, 16, 8>}, {pipeline_mode = #tpu.pipeline_mode<synchronous>, transform_indices = @transform_1, window_bounds = array<i64: 16, 32>}]} {
    %c0 = arith.constant 0 : index
    %c0_0 = arith.constant 0 : index
    %c0_1 = arith.constant 0 : index
    %0 = vector.load %arg1[%c0, %c0_0, %c0_1] : memref<4x16x8xf32, #tpu.memory_space<vmem>>, vector<4x16x8xf32>
    %cst = arith.constant dense<0.000000e+00> : vector<4x8xf32>
    %1 = vector.multi_reduction <add>, %0, %cst [1] : vector<4x16x8xf32> to vector<4x8xf32>
    %2 = vector.shape_cast %1 : vector<4x8xf32> to vector<4x1x8xf32>
    %cst_2 = arith.constant 1.600000e+01 : f32
    %3 = vector.broadcast %cst_2 : f32 to vector<4x1x8xf32>
    %4 = arith.divf %2, %3 : vector<4x1x8xf32>
    %5 = vector.broadcast %4 : vector<4x1x8xf32> to vector<4x16x8xf32>
    %6 = arith.subf %0, %5 : vector<4x16x8xf32>
    %7 = vector.broadcast %4 : vector<4x1x8xf32> to vector<4x16x8xf32>
    %8 = arith.subf %0, %7 : vector<4x16x8xf32>
    %9 = arith.mulf %6, %8 : vector<4x16x8xf32>
    %cst_3 = arith.constant dense<0.000000e+00> : vector<4x8xf32>
    %10 = vector.multi_reduction <add>, %9, %cst_3 [1] : vector<4x16x8xf32> to vector<4x8xf32>
    %11 = vector.shape_cast %10 : vector<4x8xf32> to vector<4x1x8xf32>
    %cst_4 = arith.constant 1.600000e+01 : f32
    %12 = vector.broadcast %cst_4 : f32 to vector<4x1x8xf32>
    %13 = arith.divf %11, %12 : vector<4x1x8xf32>
    %14 = vector.broadcast %4 : vector<4x1x8xf32> to vector<4x16x8xf32>
    %15 = arith.subf %0, %14 : vector<4x16x8xf32>
    %cst_5 = arith.constant 9.99999974E-6 : f32
    %16 = vector.broadcast %cst_5 : f32 to vector<4x1x8xf32>
    %17 = arith.addf %13, %16 : vector<4x1x8xf32>
    %18 = math.rsqrt %17 : vector<4x1x8xf32>
    %19 = vector.broadcast %18 : vector<4x1x8xf32> to vector<4x16x8xf32>
    %20 = arith.mulf %15, %19 : vector<4x16x8xf32>
    %cst_6 = arith.constant 0.000000e+00 : f32
    %21 = vector.broadcast %cst_6 : f32 to vector<4x16x8xf32>
    %22 = arith.maximumf %20, %21 : vector<4x16x8xf32>
    %23 = vector.extract_strided_slice %22 {offsets = [0, 0, 0], sizes = [1, 16, 8], strides = [1, 1, 1]} : vector<4x16x8xf32> to vector<1x16x8xf32>
    %24 = vector.shape_cast %23 : vector<1x16x8xf32> to vector<16x8xf32>
    %25 = vector.extract_strided_slice %22 {offsets = [1, 0, 0], sizes = [1, 16, 8], strides = [1, 1, 1]} : vector<4x16x8xf32> to vector<1x16x8xf32>
    %26 = vector.shape_cast %25 : vector<1x16x8xf32> to vector<16x8xf32>
    %27 = vector.extract_strided_slice %22 {offsets = [2, 0, 0], sizes = [1, 16, 8], strides = [1, 1, 1]} : vector<4x16x8xf32> to vector<1x16x8xf32>
    %28 = vector.shape_cast %27 : vector<1x16x8xf32> to vector<16x8xf32>
    %29 = vector.extract_strided_slice %22 {offsets = [3, 0, 0], sizes = [1, 16, 8], strides = [1, 1, 1]} : vector<4x16x8xf32> to vector<1x16x8xf32>
    %30 = vector.shape_cast %29 : vector<1x16x8xf32> to vector<16x8xf32>
    %31 = tpu.concatenate %24, %26, %28, %30 in 1 : vector<16x8xf32>, vector<16x8xf32>, vector<16x8xf32>, vector<16x8xf32> -> vector<16x32xf32>
    %32 = arith.truncf %31 : vector<16x32xf32> to vector<16x32xbf16>
    %c0_7 = arith.constant 0 : index
    %c0_8 = arith.constant 0 : index
    %33 = vector.load %arg2[%c0_7, %c0_8] : memref<16x32xbf16, #tpu.memory_space<vmem>>, vector<16x32xbf16>
    tpu.vector_store %arg2[%c0_7, %c0_8], %32 {strides = array<i32>} : memref<16x32xbf16, #tpu.memory_space<vmem>>, vector<16x32xbf16>,
    return
  }
  func.func @transform_0(%arg0: i32) -> (i32, i32, i32) {
    %c0_i32 = arith.constant 0 : i32
    %c0_i32_0 = arith.constant 0 : i32
    %c0_i32_1 = arith.constant 0 : i32
    %c0_i32_2 = arith.constant 0 : i32
    return %c0_i32, %c0_i32_0, %c0_i32_1 : i32, i32, i32
  }
  func.func @transform_1(%arg0: i32) -> (i32, i32) {
    %c0_i32 = arith.constant 0 : i32
    %c0_i32_0 = arith.constant 0 : i32
    %c0_i32_1 = arith.constant 0 : i32
    return %c0_i32, %c0_i32_0 : i32, i32
  }
}

module attributes {stable_mosaic.version = 11 : i64} {
  func.func @_proj_kernel(%arg0: i32, %arg1: i32, %arg2: memref<16x32xbf16, #tpu.memory_space<vmem>>, %arg3: memref<1x32x6xbf16, #tpu.memory_space<vmem>>, %arg4: memref<1x16x6xbf16, #tpu.memory_space<vmem>>) attributes {dimension_semantics = [#tpu.dimension_semantics<parallel>, #tpu.dimension_semantics<arbitrary>], iteration_bounds = array<i64: 1, 8>, scalar_prefetch = 0 : i64, scratch_operands = 0 : i64, tpu.core_type = #tpu.core_type<tc>, window_params = [{transform_indices = @transform_0, window_bounds = array<i64: 16, 32>}, {transform_indices = @transform_1, window_bounds = array<i64: 1, 32, 6>}, {transform_indices = @transform_2, window_bounds = array<i64: 1, 16, 6>}]} {
    %c0 = arith.constant 0 : index
    %c0_0 = arith.constant 0 : index
    %0 = vector.load %arg2[%c0, %c0_0] : memref<16x32xbf16, #tpu.memory_space<vmem>>, vector<16x32xbf16>
    %c0_1 = arith.constant 0 : index
    %c0_2 = arith.constant 0 : index
    %c0_3 = arith.constant 0 : index
    %1 = vector.load %arg3[%c0_1, %c0_2, %c0_3] : memref<1x32x6xbf16, #tpu.memory_space<vmem>>, vector<1x32x6xbf16>
    %2 = vector.shape_cast %1 : vector<1x32x6xbf16> to vector<32x6xbf16>
    %cst = arith.constant dense<0.000000e+00> : vector<16x6xf32>
    %3 = tpu.matmul %0, %2, %cst {dimension_numbers = #tpu.dot_dimension_numbers<[1], [0], [0], [1], [0, 0, 1, 1], [], []>} : vector<16x32xbf16>, vector<32x6xbf16>, vector<16x6xf32> -> vector<16x6xf32>
    %4 = arith.truncf %3 : vector<16x6xf32> to vector<16x6xbf16>
    %c0_4 = arith.constant 0 : index
    %c0_5 = arith.constant 0 : index
    %c0_6 = arith.constant 0 : index
    %5 = vector.load %arg4[%c0_4, %c0_5, %c0_6] : memref<1x16x6xbf16, #tpu.memory_space<vmem>>, vector<1x16x6xbf16>
    %6 = vector.shape_cast %5 : vector<1x16x6xbf16> to vector<16x6xbf16>
    %7 = vector.shape_cast %4 : vector<16x6xbf16> to vector<1x16x6xbf16>
    tpu.vector_store %arg4[%c0_4, %c0_5, %c0_6], %7 {strides = array<i32>} : memref<1x16x6xbf16, #tpu.memory_space<vmem>>, vector<1x16x6xbf16>,
    return
  }
  func.func @transform_0(%arg0: i32, %arg1: i32) -> (i32, i32) {
    %c0_i32 = arith.constant 0 : i32
    %c0_i32_0 = arith.constant 0 : i32
    return %arg0, %c0_i32 : i32, i32
  }
  func.func @transform_1(%arg0: i32, %arg1: i32) -> (i32, i32, i32) {
    %c0_i32 = arith.constant 0 : i32
    %c0_i32_0 = arith.constant 0 : i32
    %c0_i32_1 = arith.constant 0 : i32
    return %arg1, %c0_i32, %c0_i32_0 : i32, i32, i32
  }
  func.func @transform_2(%arg0: i32, %arg1: i32) -> (i32, i32, i32) {
    %c0_i32 = arith.constant 0 : i32
    %c0_i32_0 = arith.constant 0 : i32
    return %arg1, %arg0, %c0_i32 : i32, i32, i32
  }
}

module attributes {stable_mosaic.version = 11 : i64} {
  func.func @_gat_final_kernel(%arg0: i32, %arg1: i32, %arg2: memref<1x16x6xbf16, #tpu.memory_space<vmem>>, %arg3: memref<1x16x6xbf16, #tpu.memory_space<vmem>>, %arg4: memref<16x16xbf16, #tpu.memory_space<vmem>>, %arg5: memref<1x4xf32, #tpu.memory_space<vmem>>, %arg6: memref<16x4xf32, #tpu.memory_space<vmem>>, %arg7: memref<1x16x16xf32, #tpu.memory_space<vmem>>) attributes {dimension_semantics = [#tpu.dimension_semantics<parallel>, #tpu.dimension_semantics<arbitrary>], iteration_bounds = array<i64: 1, 4>, scalar_prefetch = 0 : i64, scratch_operands = 0 : i64, tpu.core_type = #tpu.core_type<tc>, window_params = [{transform_indices = @transform_0, window_bounds = array<i64: 1, 16, 6>}, {transform_indices = @transform_1, window_bounds = array<i64: 1, 16, 6>}, {transform_indices = @transform_2, window_bounds = array<i64: 16, 16>}, {pipeline_mode = #tpu.pipeline_mode<synchronous>, transform_indices = @transform_3, window_bounds = array<i64: 1, 4>}, {transform_indices = @transform_4, window_bounds = array<i64: 16, 4>}, {transform_indices = @transform_5, window_bounds = array<i64: 1, 16, 16>}]} {
    %c16_i32 = arith.constant 16 : i32
    %0 = arith.muli %arg0, %c16_i32 : i32
    %1 = tpu.assume_multiple %0, 16 : i32
    %c0 = arith.constant 0 : index
    %c0_0 = arith.constant 0 : index
    %c0_1 = arith.constant 0 : index
    %2 = vector.load %arg2[%c0, %c0_0, %c0_1] : memref<1x16x6xbf16, #tpu.memory_space<vmem>>, vector<1x16x6xbf16>
    %3 = vector.shape_cast %2 : vector<1x16x6xbf16> to vector<16x6xbf16>
    %c0_2 = arith.constant 0 : index
    %4 = arith.index_cast %1 : i32 to index
    %c0_3 = arith.constant 0 : index
    %5 = vector.load %arg2[%c0_2, %4, %c0_3] : memref<1x16x6xbf16, #tpu.memory_space<vmem>>, vector<1x16x6xbf16>
    %6 = vector.shape_cast %5 : vector<1x16x6xbf16> to vector<16x6xbf16>
    %7 = vector.extract_strided_slice %3 {offsets = [0, 4], sizes = [16, 1], strides = [1, 1]} : vector<16x6xbf16> to vector<16x1xbf16>
    %8 = arith.extf %7 : vector<16x1xbf16> to vector<16x1xf32>
    %9 = vector.extract_strided_slice %6 {offsets = [0, 5], sizes = [16, 1], strides = [1, 1]} : vector<16x6xbf16> to vector<16x1xbf16>
    %10 = arith.extf %9 : vector<16x1xbf16> to vector<16x1xf32>
    %11 = tpu.transpose %8, [1, 0] : vector<16x1xf32> -> vector<1x16xf32>
    %12 = vector.broadcast %10 : vector<16x1xf32> to vector<16x16xf32>
    %13 = vector.broadcast %11 : vector<1x16xf32> to vector<16x16xf32>
    %14 = arith.addf %12, %13 : vector<16x16xf32>
    %cst = arith.constant 0.000000e+00 : f32
    %15 = vector.broadcast %cst : f32 to vector<16x16xf32>
    %16 = arith.cmpf ogt, %14, %15 : vector<16x16xf32>
    %cst_4 = arith.constant 2.000000e-01 : f32
    %17 = vector.broadcast %cst_4 : f32 to vector<16x16xf32>
    %18 = arith.mulf %17, %14 : vector<16x16xf32>
    %19 = arith.select %16, %14, %18 : vector<16x16xi1>, vector<16x16xf32>
    %c0_5 = arith.constant 0 : index
    %c0_6 = arith.constant 0 : index
    %20 = vector.load %arg4[%c0_5, %c0_6] : memref<16x16xbf16, #tpu.memory_space<vmem>>, vector<16x16xbf16>
    %21 = arith.extf %20 : vector<16x16xbf16> to vector<16x16xf32>
    %22 = arith.addf %19, %21 : vector<16x16xf32>
    %cst_7 = arith.constant dense<0xFF800000> : vector<16xf32>
    %23 = vector.multi_reduction <maximumf>, %22, %cst_7 [1] : vector<16x16xf32> to vector<16xf32>
    %24 = vector.shape_cast %23 : vector<16xf32> to vector<16x1xf32>
    %25 = vector.broadcast %24 : vector<16x1xf32> to vector<16x16xf32>
    %26 = arith.subf %22, %25 : vector<16x16xf32>
    %27 = math.exp %26 : vector<16x16xf32>
    %cst_8 = arith.constant dense<0.000000e+00> : vector<16xf32>
    %28 = vector.multi_reduction <add>, %27, %cst_8 [1] : vector<16x16xf32> to vector<16xf32>
    %29 = vector.shape_cast %28 : vector<16xf32> to vector<16x1xf32>
    %30 = vector.broadcast %29 : vector<16x1xf32> to vector<16x16xf32>
    %31 = arith.divf %27, %30 : vector<16x16xf32>
    %c0_9 = arith.constant 0 : index
    %c0_10 = arith.constant 0 : index
    %c0_11 = arith.constant 0 : index
    %32 = vector.load %arg7[%c0_9, %c0_10, %c0_11] : memref<1x16x16xf32, #tpu.memory_space<vmem>>, vector<1x16x16xf32>
    %33 = vector.shape_cast %32 : vector<1x16x16xf32> to vector<16x16xf32>
    %34 = vector.shape_cast %31 : vector<16x16xf32> to vector<1x16x16xf32>
    tpu.vector_store %arg7[%c0_9, %c0_10, %c0_11], %34 {strides = array<i32>} : memref<1x16x16xf32, #tpu.memory_space<vmem>>, vector<1x16x16xf32>,
    %35 = arith.truncf %31 : vector<16x16xf32> to vector<16x16xbf16>
    %cst_12 = arith.constant dense<0.000000e+00> : vector<16x6xf32>
    %36 = tpu.matmul %35, %3, %cst_12 {dimension_numbers = #tpu.dot_dimension_numbers<[1], [0], [0], [1], [0, 0, 1, 1], [], []>} : vector<16x16xbf16>, vector<16x6xbf16>, vector<16x6xf32> -> vector<16x6xf32>
    %c0_13 = arith.constant 0 : index
    %c0_14 = arith.constant 0 : index
    %c0_15 = arith.constant 0 : index
    %37 = vector.load %arg3[%c0_13, %c0_14, %c0_15] : memref<1x16x6xbf16, #tpu.memory_space<vmem>>, vector<1x16x6xbf16>
    %38 = vector.shape_cast %37 : vector<1x16x6xbf16> to vector<16x6xbf16>
    %39 = vector.extract_strided_slice %36 {offsets = [0, 0], sizes = [16, 4], strides = [1, 1]} : vector<16x6xf32> to vector<16x4xf32>
    %40 = vector.extract_strided_slice %38 {offsets = [0, 0], sizes = [16, 4], strides = [1, 1]} : vector<16x6xbf16> to vector<16x4xbf16>
    %41 = arith.extf %40 : vector<16x4xbf16> to vector<16x4xf32>
    %42 = arith.addf %39, %41 : vector<16x4xf32>
    %c0_i32 = arith.constant 0 : i32
    %43 = arith.cmpi eq, %arg1, %c0_i32 : i32
    %44 = arith.extui %43 : i1 to i32
    %c0_i32_16 = arith.constant 0 : i32
    %45 = arith.cmpi ne, %44, %c0_i32_16 : i32
    scf.if %45 {
      %cst_22 = arith.constant 0.000000e+00 : f32
      %52 = vector.broadcast %cst_22 : f32 to vector<16x4xf32>
      %c0_23 = arith.constant 0 : index
      %c0_24 = arith.constant 0 : index
      %53 = vector.load %arg6[%c0_23, %c0_24] : memref<16x4xf32, #tpu.memory_space<vmem>>, vector<16x4xf32>
      tpu.vector_store %arg6[%c0_23, %c0_24], %52 {strides = array<i32>} : memref<16x4xf32, #tpu.memory_space<vmem>>, vector<16x4xf32>,
    } else {
    }
    %c0_17 = arith.constant 0 : index
    %c0_18 = arith.constant 0 : index
    %46 = vector.load %arg6[%c0_17, %c0_18] : memref<16x4xf32, #tpu.memory_space<vmem>>, vector<16x4xf32>
    %47 = arith.addf %46, %42 : vector<16x4xf32>
    %c0_19 = arith.constant 0 : index
    %c0_20 = arith.constant 0 : index
    %48 = vector.load %arg6[%c0_19, %c0_20] : memref<16x4xf32, #tpu.memory_space<vmem>>, vector<16x4xf32>
    tpu.vector_store %arg6[%c0_19, %c0_20], %47 {strides = array<i32>} : memref<16x4xf32, #tpu.memory_space<vmem>>, vector<16x4xf32>,
    %c3_i32 = arith.constant 3 : i32
    %49 = arith.cmpi eq, %arg1, %c3_i32 : i32
    %50 = arith.extui %49 : i1 to i32
    %c0_i32_21 = arith.constant 0 : i32
    %51 = arith.cmpi ne, %50, %c0_i32_21 : i32
    scf.if %51 {
      %c0_22 = arith.constant 0 : index
      %c0_23 = arith.constant 0 : index
      %52 = vector.load %arg6[%c0_22, %c0_23] : memref<16x4xf32, #tpu.memory_space<vmem>>, vector<16x4xf32>
      %cst_24 = arith.constant 2.500000e-01 : f32
      %53 = vector.broadcast %cst_24 : f32 to vector<16x4xf32>
      %54 = arith.mulf %52, %53 : vector<16x4xf32>
      %c0_25 = arith.constant 0 : index
      %c0_26 = arith.constant 0 : index
      %55 = vector.load %arg5[%c0_25, %c0_26] : memref<1x4xf32, #tpu.memory_space<vmem>>, vector<1x4xf32>
      %56 = vector.broadcast %55 : vector<1x4xf32> to vector<16x4xf32>
      %57 = arith.addf %54, %56 : vector<16x4xf32>
      %c0_27 = arith.constant 0 : index
      %c0_28 = arith.constant 0 : index
      %58 = vector.load %arg6[%c0_27, %c0_28] : memref<16x4xf32, #tpu.memory_space<vmem>>, vector<16x4xf32>
      tpu.vector_store %arg6[%c0_27, %c0_28], %57 {strides = array<i32>} : memref<16x4xf32, #tpu.memory_space<vmem>>, vector<16x4xf32>,
    } else {
    }
    return
  }
  func.func @transform_0(%arg0: i32, %arg1: i32) -> (i32, i32, i32) {
    %c0_i32 = arith.constant 0 : i32
    %c0_i32_0 = arith.constant 0 : i32
    %c0_i32_1 = arith.constant 0 : i32
    return %arg1, %c0_i32, %c0_i32_0 : i32, i32, i32
  }
  func.func @transform_1(%arg0: i32, %arg1: i32) -> (i32, i32, i32) {
    %c4_i32 = arith.constant 4 : i32
    %0 = arith.addi %c4_i32, %arg1 : i32
    %c0_i32 = arith.constant 0 : i32
    %c0_i32_0 = arith.constant 0 : i32
    return %0, %arg0, %c0_i32 : i32, i32, i32
  }
  func.func @transform_2(%arg0: i32, %arg1: i32) -> (i32, i32) {
    %c0_i32 = arith.constant 0 : i32
    %c0_i32_0 = arith.constant 0 : i32
    return %arg0, %c0_i32 : i32, i32
  }
  func.func @transform_3(%arg0: i32, %arg1: i32) -> (i32, i32) {
    %c0_i32 = arith.constant 0 : i32
    %c0_i32_0 = arith.constant 0 : i32
    %c0_i32_1 = arith.constant 0 : i32
    return %c0_i32, %c0_i32_0 : i32, i32
  }
  func.func @transform_4(%arg0: i32, %arg1: i32) -> (i32, i32) {
    %c0_i32 = arith.constant 0 : i32
    %c0_i32_0 = arith.constant 0 : i32
    return %arg0, %c0_i32 : i32, i32
  }
  func.func @transform_5(%arg0: i32, %arg1: i32) -> (i32, i32, i32) {
    %c0_i32 = arith.constant 0 : i32
    %c0_i32_0 = arith.constant 0 : i32
    return %arg1, %arg0, %c0_i32 : i32, i32, i32
  }
}

</mosaic_0001>

<llo_original>
// kernel: ogb_gat_forward.6
$region0: #{ogb_gat_forward.6}
  #allocation0 [shape = 'u32[]', space=smem, size = 0x4, offset = 0x4, fixed_abs, tag = 'smem constant byte address 0x4 - core index']
  #allocation1 [shape = 'u32[144,128]{1,0:T(1,128)}', space=vmem, size = 0x12000, scoped, tag = 'internal scratch']
  %s0 = inlined_call_operand.vmem [shape: bf16[8,16,10], index: 0, kind: input, shape index: {}, may-alias: {0,1}]
  %s1 = inlined_call_operand.vmem [shape: bf16[8,16,10], index: 1, kind: input, shape index: {}, may-alias: {0,1}]
  %s2 = inlined_call_operand.vmem [shape: bf16[16,16], index: 2, kind: input, shape index: {}]
  %s3 = inlined_call_operand.vmem [shape: f32[4,16,8], index: 3, kind: output, shape index: {}]
  %s4 = sld [smem:[#allocation0]]
  $region45: #{ogb_gat_forward.6} parent=0
    _
  %s6 = ssub.s32 1, %s4
  %s7 = scalar_select 0, %s6, %s4
  loop: start=0, step=1, limit=6
  $region2: #{ogb_gat_forward.6} parent=0 // loop_pre_header
    _
  $region3: #{ogb_gat_forward.6} parent=0 // loop_header
    %s9 = sphi 0, %s13
    %p10 = scmp.ge.s32.totalorder %s9, 6
    %s16 = sphi 0, %s28
    %s17 = sphi 0, %s24
    %s18 = sphi 0, %s16
    %s19 = sphi 0, %s17
    %s20 = sphi 0, %s18
    %s21 = sphi 0, %s19
    %s31 = sphi 0, %s33
    %s34 = sphi 0, %s31
    %s35 = sphi 0, %s34
    %s51 = sphi 0, %s35
    %s61 = sphi 0, %s63
    %s64 = sphi 0, %s61
    %s65 = sphi 0, %s64
    %s81 = sphi 0, %s65
    %s87 = sphi 0, %s89
    %s90 = sphi 0, %s87
    %s91 = sphi 0, %s90
    %s107 = sphi 0, %s91
    %s115 = sphi 0, %s117
    %s118 = sphi 0, %s115
    %s119 = sphi 0, %s118
    %s135 = sphi 0, %s119
  $region4: #{ogb_gat_forward.6} parent=0 // loop_header_branch
    %12 = sbr.rel (%p10) target = $region8
  $region5: #{ogb_gat_forward.6} parent=0 // loop_body
    %s14 = ssub.s32 %s9, 1
    %s15 = ssub.s32 %s9, 2
    %s22 = sadd.s32 1, %s17
    %p23 = scmp.ge.s32.totalorder %s22, 4
    %s24 = scalar_select %p23, 0, %s22
    %s25 = sadd.s32 1, %s16
    %s26 = scalar_select %p23, %s25, %s16
    %p27 = scmp.ge.s32.totalorder %s26, 1
    %s28 = scalar_select %p27, 0, %s26
    %s29 = ssub.s32 %s17, %s24
    %p30 = scmp.eq.s32.totalorder %s29, 0
    %s32 = sadd.s32 %s31, 1
    %s33 = scalar_select %p30, %s31, %s32
    %p36 = pneg %p30
    %p37 = scmp.eq.s32.totalorder %s9, 3
    %p38 = por %p36, %p37
    %p39 = scmp.ne.s32.totalorder %s31, %s34
    %p40 = scmp.eq.s32.totalorder %s9, 0
    %p41 = por %p39, %p40
    %p42 = scmp.ne.s32.totalorder %s31, %s34
    %p43 = scmp.eq.s32.totalorder %s14, 3
    %p44 = por %p42, %p43
    %p45 = scmp.ne.s32.totalorder %s34, %s35
    %p46 = scmp.eq.s32.totalorder %s14, 0
    %p47 = por %p45, %p46
    %p48 = scmp.ne.s32.totalorder %s34, %s35
    %p49 = scmp.eq.s32.totalorder %s15, 3
    %p50 = por %p48, %p49
    %p52 = scmp.ne.s32.totalorder %s35, %s51
    %p53 = scmp.eq.s32.totalorder %s15, 0
    %p54 = por %p52, %p53
    %s55 = sadd.s32 %s17, 4
    %s56 = sadd.s32 %s24, 4
    %s57 = ssub.s32 %s55, %s56
    %s58 = ssub.s32 %s16, %s28
    %s59 = sor.u32 %s57, %s58
    %p60 = scmp.eq.s32.totalorder %s59, 0
    %s62 = sadd.s32 %s61, 1
    %s63 = scalar_select %p60, %s61, %s62
    %p66 = pneg %p60
    %p67 = scmp.eq.s32.totalorder %s9, 3
    %p68 = por %p66, %p67
    %p69 = scmp.ne.s32.totalorder %s61, %s64
    %p70 = scmp.eq.s32.totalorder %s9, 0
    %p71 = por %p69, %p70
    %p72 = scmp.ne.s32.totalorder %s61, %s64
    %p73 = scmp.eq.s32.totalorder %s14, 3
    %p74 = por %p72, %p73
    %p75 = scmp.ne.s32.totalorder %s64, %s65
    %p76 = scmp.eq.s32.totalorder %s14, 0
    %p77 = por %p75, %p76
    %p78 = scmp.ne.s32.totalorder %s64, %s65
    %p79 = scmp.eq.s32.totalorder %s15, 3
    %p80 = por %p78, %p79
    %p82 = scmp.ne.s32.totalorder %s65, %s81
    %p83 = scmp.eq.s32.totalorder %s15, 0
    %p84 = por %p82, %p83
    %s85 = ssub.s32 %s16, %s28
    %p86 = scmp.eq.s32.totalorder %s85, 0
    %s88 = sadd.s32 %s87, 1
    %s89 = scalar_select %p86, %s87, %s88
    %p92 = pneg %p86
    %p93 = scmp.eq.s32.totalorder %s9, 3
    %p94 = por %p92, %p93
    %p95 = scmp.ne.s32.totalorder %s87, %s90
    %p96 = scmp.eq.s32.totalorder %s9, 0
    %p97 = por %p95, %p96
    %p98 = scmp.ne.s32.totalorder %s87, %s90
    %p99 = scmp.eq.s32.totalorder %s14, 3
    %p100 = por %p98, %p99
    %p101 = scmp.ne.s32.totalorder %s90, %s91
    %p102 = scmp.eq.s32.totalorder %s14, 0
    %p103 = por %p101, %p102
    %p104 = scmp.ne.s32.totalorder %s90, %s91
    %p105 = scmp.eq.s32.totalorder %s15, 3
    %p106 = por %p104, %p105
    %p108 = scmp.ne.s32.totalorder %s91, %s107
    %p109 = scmp.eq.s32.totalorder %s15, 0
    %p110 = por %p108, %p109
    %s111 = ssub.s32 %s17, %s24
    %s112 = ssub.s32 %s16, %s28
    %s113 = sor.u32 %s111, %s112
    %p114 = scmp.eq.s32.totalorder %s113, 0
    %s116 = sadd.s32 %s115, 1
    %s117 = scalar_select %p114, %s115, %s116
    %p120 = pneg %p114
    %p121 = scmp.eq.s32.totalorder %s9, 3
    %p122 = por %p120, %p121
    %p123 = scmp.ne.s32.totalorder %s115, %s118
    %p124 = scmp.eq.s32.totalorder %s9, 0
    %p125 = por %p123, %p124
    %p126 = scmp.ne.s32.totalorder %s115, %s118
    %p127 = scmp.eq.s32.totalorder %s14, 3
    %p128 = por %p126, %p127
    %p129 = scmp.ne.s32.totalorder %s118, %s119
    %p130 = scmp.eq.s32.totalorder %s14, 0
    %p131 = por %p129, %p130
    %p132 = scmp.ne.s32.totalorder %s118, %s119
    %p133 = scmp.eq.s32.totalorder %s15, 3
    %p134 = por %p132, %p133
    %p136 = scmp.ne.s32.totalorder %s119, %s135
    %p137 = scmp.eq.s32.totalorder %s15, 0
    %p138 = por %p136, %p137
    %p139 = scmp.le.s32.totalorder 1, %s9
    %p140 = scmp.lt.s32.totalorder %s9, 5
    %p141 = pnand %p139, %p140
    %p142 = pneg %p141
    // Predicated region
    $region9: #{ogb_gat_forward.6} parent=5 // pred_check
      _
    $region10: #{ogb_gat_forward.6} parent=5 // pred_check_branch
      %144 = sbr.rel (%p141) target = $region12
    $region11: #{ogb_gat_forward.6} parent=5 // pred_region
      %s145 = ssub.s32 %s9, 1
      // Predicated region
      $region13: #{ogb_gat_forward.6} parent=11 // pred_check
        %p146 = pneg %p103
      $region14: #{ogb_gat_forward.6} parent=11 // pred_check_branch
        %148 = sbr.rel (%p146) target = $region16
      $region15: #{ogb_gat_forward.6} parent=11 // pred_region
        %s149 = smul.u32 2, %s18
        %p150 = scmp.lt.s32.totalorder %s149, 1
        %s151 = scalar_select %p150, %s149, 1
        %s152 = smul.addr %s151, 4
        %s153 = scalar_lea.vmem %s2, %s152
        %s154 = smul.u32 2, %s18
      $region16: #{ogb_gat_forward.6} parent=11 // pred_fallthru
        _
    $region12: #{ogb_gat_forward.6} parent=5 // pred_fallthru
      _
    %p155 = scmp.lt.s32.totalorder %s9, 4
    // Predicated region
    $region17: #{ogb_gat_forward.6} parent=5 // pred_check
      %p156 = pneg %p155
    $region18: #{ogb_gat_forward.6} parent=5 // pred_check_branch
      %158 = sbr.rel (%p156) target = $region20
    $region19: #{ogb_gat_forward.6} parent=5 // pred_region
      // Predicated region
      $region21: #{ogb_gat_forward.6} parent=19 // pred_check
        %p159 = pneg %p41
      $region22: #{ogb_gat_forward.6} parent=19 // pred_check_branch
        %161 = sbr.rel (%p159) target = $region24
      $region23: #{ogb_gat_forward.6} parent=19 // pred_region
        %p162 = scmp.lt.s32.totalorder %s17, 7
        %s163 = scalar_select %p162, %s17, 7
        %s164 = smul.addr %s163, 2
        %s165 = smul.addr %s164, 4
        %s166 = scalar_lea.vmem %s0, %s165
      $region24: #{ogb_gat_forward.6} parent=19 // pred_fallthru
        _
      // Predicated region
      $region25: #{ogb_gat_forward.6} parent=19 // pred_check
        %p167 = pneg %p71
      $region26: #{ogb_gat_forward.6} parent=19 // pred_check_branch
        %169 = sbr.rel (%p167) target = $region28
      $region27: #{ogb_gat_forward.6} parent=19 // pred_region
        %s170 = sadd.s32 %s17, 4
        %s171 = smul.u32 2, %s16
        %p172 = scmp.lt.s32.totalorder %s170, 7
        %s173 = scalar_select %p172, %s170, 7
        %p174 = scmp.lt.s32.totalorder %s171, 1
        %s175 = scalar_select %p174, %s171, 1
        %s176 = smul.addr %s173, 2
        %s177 = sadd.s32 %s175, %s176
        %s178 = smul.addr %s177, 4
        %s179 = scalar_lea.vmem %s1, %s178
        %s180 = sadd.s32 %s17, 4
        %s181 = smul.u32 2, %s16
      $region28: #{ogb_gat_forward.6} parent=19 // pred_fallthru
        _
    $region20: #{ogb_gat_forward.6} parent=5 // pred_fallthru
      _
    %p182 = scmp.le.s32.totalorder 1, %s9
    %p183 = scmp.lt.s32.totalorder %s9, 5
    %p184 = pnand %p182, %p183
    %p185 = pneg %p184
    // Predicated region
    $region29: #{ogb_gat_forward.6} parent=5 // pred_check
      _
    $region30: #{ogb_gat_forward.6} parent=5 // pred_check_branch
      %187 = sbr.rel (%p184) target = $region32
    $region31: #{ogb_gat_forward.6} parent=5 // pred_region
      %s188 = ssub.s32 %s9, 1
      %p189 = scmp.lt.s32.totalorder %s19, 7
      %s190 = scalar_select %p189, %s19, 7
      %s191 = smul.addr %s190, 2
      %s192 = smul.addr %s191, 4
      %s193 = scalar_lea.vmem %s0, %s192
      %p194 = pneg %p47
      %p195 = pneg %p44
      %s196 = sadd.s32 %s19, 4
      %s197 = smul.u32 2, %s18
      %p198 = scmp.lt.s32.totalorder %s196, 7
      %s199 = scalar_select %p198, %s196, 7
      %p200 = scmp.lt.s32.totalorder %s197, 1
      %s201 = scalar_select %p200, %s197, 1
      %s202 = smul.addr %s199, 2
      %s203 = sadd.s32 %s201, %s202
      %s204 = smul.addr %s203, 4
      %s205 = scalar_lea.vmem %s1, %s204
      %p206 = pneg %p77
      %p207 = pneg %p74
      %s208 = smul.u32 2, %s18
      %p209 = scmp.lt.s32.totalorder %s208, 1
      %s210 = scalar_select %p209, %s208, 1
      %s211 = smul.addr %s210, 4
      %s212 = scalar_lea.vmem %s2, %s211
      %p213 = pneg %p103
      %p214 = pneg %p100
      %p215 = pneg %p131
      %p216 = pneg %p128
      %s217 = smul.u32 2, %s18
      %p218 = scmp.lt.s32.totalorder %s19, 3
      %s219 = scalar_select %p218, %s19, 3
      %p220 = scmp.lt.s32.totalorder %s217, 1
      %s221 = scalar_select %p220, %s217, 1
      %s222 = smul.addr %s219, 2
      %s223 = sadd.s32 %s221, %s222
      %s224 = smul.addr %s223, 8
      %s225 = scalar_lea.vmem %s3, %s224
      %p226 = scmp.lt.s32.totalorder %s19, 7
      %s227 = scalar_select %p226, %s19, 7
      %s228 = smul.addr %s227, 2
      %s229 = smul.addr %s228, 4
      %s230 = scalar_lea.vmem %s0, %s229
      %s231 = sadd.s32 %s19, 4
      %s232 = smul.u32 2, %s18
      %p233 = scmp.lt.s32.totalorder %s231, 7
      %s234 = scalar_select %p233, %s231, 7
      %p235 = scmp.lt.s32.totalorder %s232, 1
      %s236 = scalar_select %p235, %s232, 1
      %s237 = smul.addr %s234, 2
      %s238 = sadd.s32 %s236, %s237
      %s239 = smul.addr %s238, 4
      %s240 = scalar_lea.vmem %s1, %s239
      %s241 = sadd.s32 %s19, 4
      %s242 = smul.u32 2, %s18
      %s243 = smul.u32 2, %s18
      %p244 = scmp.lt.s32.totalorder %s243, 1
      %s245 = scalar_select %p244, %s243, 1
      %s246 = smul.addr %s245, 4
      %s247 = scalar_lea.vmem %s2, %s246
      %s248 = smul.u32 2, %s18
      %s249 = smul.u32 2, %s18
      %p250 = scmp.lt.s32.totalorder %s19, 3
      %s251 = scalar_select %p250, %s19, 3
      %p252 = scmp.lt.s32.totalorder %s249, 1
      %s253 = scalar_select %p252, %s249, 1
      %s254 = smul.addr %s251, 2
      %s255 = sadd.s32 %s253, %s254
      %s256 = smul.addr %s255, 8
      %s257 = scalar_lea.vmem %s3, %s256
      %s258 = smul.u32 2, %s18
      %s260 = smul.u32 %s18, 16
      %v261 = vld [vmem:[%s230] sm:$0xf]
      %v262 = vld [vmem:[%s230 + $0x4] sm:$0xf]
      %s263 = sshra.s32 %s260, 3
      %s264 = sand.u32 %s260, 7
      %s265 = smul.addr %s263, 4
      %s266 = scalar_lea.vmem %s230, %s265
      %v267 = vld [vmem:[%s266] sm:$0xf]
      %v268 = vld [vmem:[%s266 + $0x4] sm:$0xf]
      %v269 = vunpack.c.l.bf16 %v261
      %v270 = vunpack.c.l.bf16 %v262
      %v271 = vunpack.c.l.bf16 %v267
      %v272 = vunpack.c.l.bf16 %v268
      %275 = vrot.lane.b32.xlu0 %v269, 120
      %v276 = vpop.permute.xlu0 %275
      %277 = vrot.lane.b32.xlu0 %v270, 120
      %v278 = vpop.permute.xlu0 %277
      %281 = vxpose.xlu0.b32.start [1/16] %v276, 128
      %282 = vxpose.xlu0.b32.cont [2/16] %v278, 128
      %283 = vxpose.xlu0.b32.cont [3/16] 0.0, 128
      %284 = vxpose.xlu0.b32.cont [4/16] 0.0, 128
      %285 = vxpose.xlu0.b32.cont [5/16] 0.0, 128
      %286 = vxpose.xlu0.b32.cont [6/16] 0.0, 128
      %287 = vxpose.xlu0.b32.cont [7/16] 0.0, 128
      %288 = vxpose.xlu0.b32.cont [8/16] 0.0, 128
      %289 = vxpose.xlu0.b32.cont [9/16] 0.0, 128
      %290 = vxpose.xlu0.b32.cont [10/16] 0.0, 128
      %291 = vxpose.xlu0.b32.cont [11/16] 0.0, 128
      %292 = vxpose.xlu0.b32.cont [12/16] 0.0, 128
      %293 = vxpose.xlu0.b32.cont [13/16] 0.0, 128
      %294 = vxpose.xlu0.b32.cont [14/16] 0.0, 128
      %295 = vxpose.xlu0.b32.cont [15/16] 0.0, 128
      %296 = vxpose.xlu0.b32.end [16/16] 0.0, 128
      %v297 = vpop.trf.xlu0
      %v298 = vpop.trf.xlu0
      %v299 = vpop.trf.xlu0
      %v300 = vpop.trf.xlu0
      %v301 = vpop.trf.xlu0
      %v302 = vpop.trf.xlu0
      %v303 = vpop.trf.xlu0
      %v304 = vpop.trf.xlu0
      %v305 = vpop.trf.xlu0
      %v306 = vpop.trf.xlu0
      %v307 = vpop.trf.xlu0
      %v308 = vpop.trf.xlu0
      %v309 = vpop.trf.xlu0
      %v310 = vpop.trf.xlu0
      %v311 = vpop.trf.xlu0
      %v312 = vpop.trf.xlu0
      %314 = vset.pattern.permute.xlu0 9
      %315 = vperm.xlu0 %314, %v271
      %v316 = vpop.permute.xlu0 %315
      %319 = vset.pattern.permute.xlu0 9
      %320 = vperm.xlu0 %319, %v272
      %v321 = vpop.permute.xlu0 %320
      %v323 = vlaneseq
      %v324 = vshrl.u32 %v323, 7
      %v325 = vsub.s32 0, %v324
      %v326 = vrot.slane %v297, %v325
      %v327 = vadd.f32 %v316, %v326
      %v328 = vadd.f32 %v321, %v326
      %vm329 = vcmp.gt.f32.partialorder %v327, 0.0
      %vm330 = vcmp.gt.f32.partialorder %v328, 0.0
      %v331 = vmul.f32 %v327, 0.2
      %v332 = vmul.f32 %v328, 0.2
      %v333 = vsel %vm329, %v327, %v331
      %v334 = vsel %vm330, %v328, %v332
      %v335 = vld [vmem:[%s247] sm:$0xf]
      %v336 = vld [vmem:[%s247 + $0x4] sm:$0xf]
      %v337 = vunpack.c.l.bf16 %v335
      %v338 = vunpack.c.l.bf16 %v336
      %v339 = vadd.f32 %v333, %v337
      %v340 = vadd.f32 %v334, %v338
      %vm341 = vcmask 130048
      %v342 = vsel %vm341, %v339, -inf
      %343 = vmax.xlane.f32.xlu0 %v342
      %v344 = vpop.xlane.xlu0 %343
      %v345 = vsel %vm341, %v340, -inf
      %346 = vmax.xlane.f32.xlu0 %v345
      %v347 = vpop.xlane.xlu0 %346
      %v348 = vsub.f32 %v339, %v344
      %v349 = vsub.f32 %v340, %v347
      %v350 = vmul.f32 %v348, 1.442695
      %v351 = vpow.pop %v350
      %v352 = vmul.f32 %v349, 1.442695
      %v353 = vpow.pop %v352
      %v354 = vsel %vm341, %v351, 0.0
      %355 = vadd.xlane.f32.xlu0 %v354
      %v356 = vpop.xlane.xlu0 %355
      %v357 = vsel %vm341, %v353, 0.0
      %358 = vadd.xlane.f32.xlu0 %v357
      %v359 = vpop.xlane.xlu0 %358
      %v360 = vrcp.pop %v356
      %v361 = vrcp.pop %v359
      %v362 = vmul.f32 %v351, %v360
      %v363 = vmul.f32 %v353, %v361
      %v364 = vpack.c.bf16 %v363, %v362
      %v367 = vunpack.c.l.b16 %v261
      %v368 = vunpack.c.l.b16 %v262
      %v369 = vpack.c.b16 %v368, %v367
      %v372 = vsel %vm341, %v364, 0
      %374 = vmatprep.subr.bf16.mxu0 0
      %375 = vmatpush1.bf16.msra.mxu0 %v369
      %376 = vmatprep.subr.bf16.mxu0 0
      %377 = vmatpush1.bf16.msra.mxu0 0
      %378 = vmatprep.subr.bf16.mxu0 0
      %379 = vmatpush1.bf16.msra.mxu0 0
      %380 = vmatprep.subr.bf16.mxu0 0
      %381 = vmatpush1.bf16.msra.mxu0 0
      %382 = vmatprep.subr.bf16.mxu0 0
      %383 = vmatpush1.bf16.msra.mxu0 0
      %384 = vmatprep.subr.bf16.mxu0 0
      %385 = vmatpush1.bf16.msra.mxu0 0
      %386 = vmatprep.subr.bf16.mxu0 0
      %387 = vmatpush1.bf16.msra.mxu0 0
      %388 = vmatprep.subr.bf16.mxu0 0
      %389 = vmatpush1.bf16.msra.mxu0 0
      %390 = vmatprep.subr.bf16.mxu0 0
      %391 = vmatpush1.bf16.msra.mxu0 0
      %392 = vmatprep.subr.bf16.mxu0 0
      %393 = vmatpush1.bf16.msra.mxu0 0
      %394 = vmatprep.subr.bf16.mxu0 0
      %395 = vmatpush1.bf16.msra.mxu0 0
      %396 = vmatprep.subr.bf16.mxu0 0
      %397 = vmatpush1.bf16.msra.mxu0 0
      %398 = vmatprep.subr.bf16.mxu0 0
      %399 = vmatpush1.bf16.msra.mxu0 0
      %400 = vmatprep.subr.bf16.mxu0 0
      %401 = vmatpush1.bf16.msra.mxu0 0
      %402 = vmatprep.subr.bf16.mxu0 0
      %403 = vmatpush1.bf16.msra.mxu0 0
      %404 = vmatprep.subr.bf16.mxu0 0
      %405 = vmatpush1.bf16.msra.mxu0 0
      %406 = vmatprep.mubr.bf16.mxu0 0
      %407 = vmatmul.mubr.bf16.gmra.mrb[0].mxu0 %v372
      %v408 = vpop.f32.mrb[0].mxu0
      %v409 = vadd.f32 0.0, %v408
      %v410 = vpop.f32.mrb[0].mxu0
      %v411 = vpop.f32.mrb[0].mxu0
      %v412 = vadd.f32 0.0, %v411
      %v413 = vpop.f32.mrb[0].mxu0
      %414 = vdwg.mxu0
      %v415 = vld [vmem:[%s240] sm:$0xf]
      %v416 = vld [vmem:[%s240 + $0x4] sm:$0xf]
      %v417 = vunpack.c.l.bf16 %v415
      %v418 = vunpack.c.l.bf16 %v416
      %v419 = vadd.f32 %v409, %v417
      %v420 = vadd.f32 %v412, %v418
      %vm421 = vcmask 64512
      %422 = vst.msk [vmem:[%s257] sm:$0xff] %vm421, %v419
      %423 = vst.msk [vmem:[%s257 + $0x8] sm:$0xff] %vm421, %v420
      %s424 = smul.u32 2, %s18
      %p425 = scmp.lt.s32.totalorder %s19, 3
      %s426 = scalar_select %p425, %s19, 3
      %p427 = scmp.lt.s32.totalorder %s424, 1
      %s428 = scalar_select %p427, %s424, 1
      %s429 = smul.addr %s426, 2
      %s430 = sadd.s32 %s428, %s429
      %s431 = smul.addr %s430, 8
      %s432 = scalar_lea.vmem %s3, %s431
      // Predicated region
      $region33: #{ogb_gat_forward.6} parent=31 // pred_check
        %p433 = pneg %p128
      $region34: #{ogb_gat_forward.6} parent=31 // pred_check_branch
        %435 = sbr.rel (%p433) target = $region36
      $region35: #{ogb_gat_forward.6} parent=31 // pred_region
        %s436 = smul.u32 2, %s18
      $region36: #{ogb_gat_forward.6} parent=31 // pred_fallthru
        _
    $region32: #{ogb_gat_forward.6} parent=5 // pred_fallthru
      _
    %p437 = scmp.le.s32.totalorder 2, %s9
    // Predicated region
    $region37: #{ogb_gat_forward.6} parent=5 // pred_check
      %p438 = pneg %p437
    $region38: #{ogb_gat_forward.6} parent=5 // pred_check_branch
      %440 = sbr.rel (%p438) target = $region40
    $region39: #{ogb_gat_forward.6} parent=5 // pred_region
      %s441 = ssub.s32 %s9, 2
      // Predicated region
      $region41: #{ogb_gat_forward.6} parent=39 // pred_check
        %p442 = pneg %p134
      $region42: #{ogb_gat_forward.6} parent=39 // pred_check_branch
        %444 = sbr.rel (%p442) target = $region44
      $region43: #{ogb_gat_forward.6} parent=39 // pred_region
        %s445 = smul.u32 2, %s20
        %p446 = scmp.lt.s32.totalorder %s21, 3
        %s447 = scalar_select %p446, %s21, 3
        %p448 = scmp.lt.s32.totalorder %s445, 1
        %s449 = scalar_select %p448, %s445, 1
        %s450 = smul.addr %s447, 2
        %s451 = sadd.s32 %s449, %s450
        %s452 = smul.addr %s451, 8
        %s453 = scalar_lea.vmem %s3, %s452
      $region44: #{ogb_gat_forward.6} parent=39 // pred_fallthru
        _
    $region40: #{ogb_gat_forward.6} parent=5 // pred_fallthru
      _
  $region6: #{ogb_gat_forward.6} parent=0 // loop_footer
    %s13 = sadd.s32 1, %s9
  $region7: #{ogb_gat_forward.6} parent=0 // loop_footer_branch
    %8 = sbr.rel target = $region3
  $region8: #{ogb_gat_forward.6} parent=0 // loop_exit
    _

// kernel: ogb_gat_forward.5
$region0: #{ogb_gat_forward.5}
  #allocation0 [shape = 'u32[]', space=smem, size = 0x4, offset = 0x4, fixed_abs, tag = 'smem constant byte address 0x4 - core index']
  #allocation1 [shape = 'u32[144,128]{1,0:T(1,128)}', space=vmem, size = 0x12000, scoped, tag = 'internal scratch']
  %s0 = inlined_call_operand.vmem [shape: bf16[16,16], index: 0, kind: input, shape index: {}]
  %s1 = inlined_call_operand.vmem [shape: bf16[8,16,10], index: 1, kind: input, shape index: {}]
  %s2 = inlined_call_operand.vmem [shape: bf16[8,16,10], index: 2, kind: output, shape index: {}]
  %s3 = sld [smem:[#allocation0]]
  $region41: #{ogb_gat_forward.5} parent=0
    _
  %s5 = ssub.s32 1, %s3
  %s6 = scalar_select 0, %s5, %s3
  loop: start=0, step=1, limit=10
  $region2: #{ogb_gat_forward.5} parent=0 // loop_pre_header
    _
  $region3: #{ogb_gat_forward.5} parent=0 // loop_header
    %s8 = sphi 0, %s12
    %p9 = scmp.ge.s32.totalorder %s8, 10
    %s15 = sphi 0, %s27
    %s16 = sphi 0, %s23
    %s17 = sphi 0, %s15
    %s18 = sphi 0, %s16
    %s19 = sphi 0, %s17
    %s20 = sphi 0, %s18
    %s30 = sphi 0, %s32
    %s33 = sphi 0, %s30
    %s34 = sphi 0, %s33
    %s50 = sphi 0, %s34
    %s56 = sphi 0, %s58
    %s59 = sphi 0, %s56
    %s60 = sphi 0, %s59
    %s76 = sphi 0, %s60
    %s84 = sphi 0, %s86
    %s87 = sphi 0, %s84
    %s88 = sphi 0, %s87
    %s104 = sphi 0, %s88
  $region4: #{ogb_gat_forward.5} parent=0 // loop_header_branch
    %11 = sbr.rel (%p9) target = $region8
  $region5: #{ogb_gat_forward.5} parent=0 // loop_body
    %s13 = ssub.s32 %s8, 1
    %s14 = ssub.s32 %s8, 2
    %s21 = sadd.s32 1, %s16
    %p22 = scmp.ge.s32.totalorder %s21, 8
    %s23 = scalar_select %p22, 0, %s21
    %s24 = sadd.s32 1, %s15
    %s25 = scalar_select %p22, %s24, %s15
    %p26 = scmp.ge.s32.totalorder %s25, 1
    %s27 = scalar_select %p26, 0, %s25
    %s28 = ssub.s32 %s15, %s27
    %p29 = scmp.eq.s32.totalorder %s28, 0
    %s31 = sadd.s32 %s30, 1
    %s32 = scalar_select %p29, %s30, %s31
    %p35 = pneg %p29
    %p36 = scmp.eq.s32.totalorder %s8, 7
    %p37 = por %p35, %p36
    %p38 = scmp.ne.s32.totalorder %s30, %s33
    %p39 = scmp.eq.s32.totalorder %s8, 0
    %p40 = por %p38, %p39
    %p41 = scmp.ne.s32.totalorder %s30, %s33
    %p42 = scmp.eq.s32.totalorder %s13, 7
    %p43 = por %p41, %p42
    %p44 = scmp.ne.s32.totalorder %s33, %s34
    %p45 = scmp.eq.s32.totalorder %s13, 0
    %p46 = por %p44, %p45
    %p47 = scmp.ne.s32.totalorder %s33, %s34
    %p48 = scmp.eq.s32.totalorder %s14, 7
    %p49 = por %p47, %p48
    %p51 = scmp.ne.s32.totalorder %s34, %s50
    %p52 = scmp.eq.s32.totalorder %s14, 0
    %p53 = por %p51, %p52
    %s54 = ssub.s32 %s16, %s23
    %p55 = scmp.eq.s32.totalorder %s54, 0
    %s57 = sadd.s32 %s56, 1
    %s58 = scalar_select %p55, %s56, %s57
    %p61 = pneg %p55
    %p62 = scmp.eq.s32.totalorder %s8, 7
    %p63 = por %p61, %p62
    %p64 = scmp.ne.s32.totalorder %s56, %s59
    %p65 = scmp.eq.s32.totalorder %s8, 0
    %p66 = por %p64, %p65
    %p67 = scmp.ne.s32.totalorder %s56, %s59
    %p68 = scmp.eq.s32.totalorder %s13, 7
    %p69 = por %p67, %p68
    %p70 = scmp.ne.s32.totalorder %s59, %s60
    %p71 = scmp.eq.s32.totalorder %s13, 0
    %p72 = por %p70, %p71
    %p73 = scmp.ne.s32.totalorder %s59, %s60
    %p74 = scmp.eq.s32.totalorder %s14, 7
    %p75 = por %p73, %p74
    %p77 = scmp.ne.s32.totalorder %s60, %s76
    %p78 = scmp.eq.s32.totalorder %s14, 0
    %p79 = por %p77, %p78
    %s80 = ssub.s32 %s16, %s23
    %s81 = ssub.s32 %s15, %s27
    %s82 = sor.u32 %s80, %s81
    %p83 = scmp.eq.s32.totalorder %s82, 0
    %s85 = sadd.s32 %s84, 1
    %s86 = scalar_select %p83, %s84, %s85
    %p89 = pneg %p83
    %p90 = scmp.eq.s32.totalorder %s8, 7
    %p91 = por %p89, %p90
    %p92 = scmp.ne.s32.totalorder %s84, %s87
    %p93 = scmp.eq.s32.totalorder %s8, 0
    %p94 = por %p92, %p93
    %p95 = scmp.ne.s32.totalorder %s84, %s87
    %p96 = scmp.eq.s32.totalorder %s13, 7
    %p97 = por %p95, %p96
    %p98 = scmp.ne.s32.totalorder %s87, %s88
    %p99 = scmp.eq.s32.totalorder %s13, 0
    %p100 = por %p98, %p99
    %p101 = scmp.ne.s32.totalorder %s87, %s88
    %p102 = scmp.eq.s32.totalorder %s14, 7
    %p103 = por %p101, %p102
    %p105 = scmp.ne.s32.totalorder %s88, %s104
    %p106 = scmp.eq.s32.totalorder %s14, 0
    %p107 = por %p105, %p106
    %p108 = scmp.le.s32.totalorder 1, %s8
    %p109 = scmp.lt.s32.totalorder %s8, 9
    %p110 = pnand %p108, %p109
    %p111 = pneg %p110
    // Predicated region
    $region9: #{ogb_gat_forward.5} parent=5 // pred_check
      _
    $region10: #{ogb_gat_forward.5} parent=5 // pred_check_branch
      %113 = sbr.rel (%p110) target = $region12
    $region11: #{ogb_gat_forward.5} parent=5 // pred_region
      %s114 = ssub.s32 %s8, 1
      // Predicated region
      $region13: #{ogb_gat_forward.5} parent=11 // pred_check
        %p115 = pneg %p46
      $region14: #{ogb_gat_forward.5} parent=11 // pred_check_branch
        %117 = sbr.rel (%p115) target = $region16
      $region15: #{ogb_gat_forward.5} parent=11 // pred_region
        %s118 = smul.u32 2, %s17
        %p119 = scmp.lt.s32.totalorder %s118, 1
        %s120 = scalar_select %p119, %s118, 1
        %s121 = smul.addr %s120, 4
        %s122 = scalar_lea.vmem %s0, %s121
        %s123 = smul.u32 2, %s17
      $region16: #{ogb_gat_forward.5} parent=11 // pred_fallthru
        _
    $region12: #{ogb_gat_forward.5} parent=5 // pred_fallthru
      _
    %p124 = scmp.lt.s32.totalorder %s8, 8
    // Predicated region
    $region17: #{ogb_gat_forward.5} parent=5 // pred_check
      %p125 = pneg %p124
    $region18: #{ogb_gat_forward.5} parent=5 // pred_check_branch
      %127 = sbr.rel (%p125) target = $region20
    $region19: #{ogb_gat_forward.5} parent=5 // pred_region
      // Predicated region
      $region21: #{ogb_gat_forward.5} parent=19 // pred_check
        %p128 = pneg %p66
      $region22: #{ogb_gat_forward.5} parent=19 // pred_check_branch
        %130 = sbr.rel (%p128) target = $region24
      $region23: #{ogb_gat_forward.5} parent=19 // pred_region
        %p131 = scmp.lt.s32.totalorder %s16, 7
        %s132 = scalar_select %p131, %s16, 7
        %s133 = smul.addr %s132, 2
        %s134 = smul.addr %s133, 4
        %s135 = scalar_lea.vmem %s1, %s134
      $region24: #{ogb_gat_forward.5} parent=19 // pred_fallthru
        _
    $region20: #{ogb_gat_forward.5} parent=5 // pred_fallthru
      _
    %p136 = scmp.le.s32.totalorder 1, %s8
    %p137 = scmp.lt.s32.totalorder %s8, 9
    %p138 = pnand %p136, %p137
    %p139 = pneg %p138
    // Predicated region
    $region25: #{ogb_gat_forward.5} parent=5 // pred_check
      _
    $region26: #{ogb_gat_forward.5} parent=5 // pred_check_branch
      %141 = sbr.rel (%p138) target = $region28
    $region27: #{ogb_gat_forward.5} parent=5 // pred_region
      %s142 = ssub.s32 %s8, 1
      %s143 = smul.u32 2, %s17
      %p144 = scmp.lt.s32.totalorder %s143, 1
      %s145 = scalar_select %p144, %s143, 1
      %s146 = smul.addr %s145, 4
      %s147 = scalar_lea.vmem %s0, %s146
      %p148 = pneg %p46
      %p149 = pneg %p43
      %p150 = scmp.lt.s32.totalorder %s18, 7
      %s151 = scalar_select %p150, %s18, 7
      %s152 = smul.addr %s151, 2
      %s153 = smul.addr %s152, 4
      %s154 = scalar_lea.vmem %s1, %s153
      %p155 = pneg %p72
      %p156 = pneg %p69
      %p157 = pneg %p100
      %p158 = pneg %p97
      %s159 = smul.u32 2, %s17
      %p160 = scmp.lt.s32.totalorder %s18, 7
      %s161 = scalar_select %p160, %s18, 7
      %p162 = scmp.lt.s32.totalorder %s159, 1
      %s163 = scalar_select %p162, %s159, 1
      %s164 = smul.addr %s161, 2
      %s165 = sadd.s32 %s163, %s164
      %s166 = smul.addr %s165, 4
      %s167 = scalar_lea.vmem %s2, %s166
      %s168 = smul.u32 2, %s17
      %p169 = scmp.lt.s32.totalorder %s168, 1
      %s170 = scalar_select %p169, %s168, 1
      %s171 = smul.addr %s170, 4
      %s172 = scalar_lea.vmem %s0, %s171
      %s173 = smul.u32 2, %s17
      %p174 = scmp.lt.s32.totalorder %s18, 7
      %s175 = scalar_select %p174, %s18, 7
      %s176 = smul.addr %s175, 2
      %s177 = smul.addr %s176, 4
      %s178 = scalar_lea.vmem %s1, %s177
      %s179 = smul.u32 2, %s17
      %p180 = scmp.lt.s32.totalorder %s18, 7
      %s181 = scalar_select %p180, %s18, 7
      %p182 = scmp.lt.s32.totalorder %s179, 1
      %s183 = scalar_select %p182, %s179, 1
      %s184 = smul.addr %s181, 2
      %s185 = sadd.s32 %s183, %s184
      %s186 = smul.addr %s185, 4
      %s187 = scalar_lea.vmem %s2, %s186
      %s188 = smul.u32 2, %s17
      %v190 = vld [vmem:[%s172] sm:$0xf]
      %v191 = vld [vmem:[%s172 + $0x4] sm:$0xf]
      %v192 = vld [vmem:[%s178] sm:$0xf]
      %v193 = vld [vmem:[%s178 + $0x4] sm:$0xf]
      %v196 = vunpack.c.l.b16 %v190
      %v197 = vunpack.c.l.b16 %v191
      %v198 = vpack.c.b16 %v197, %v196
      %v201 = vunpack.c.l.b16 %v192
      %v202 = vunpack.c.l.b16 %v193
      %v203 = vpack.c.b16 %v202, %v201
      %vm205 = vcmask 130048
      %v207 = vsel %vm205, %v198, 0
      %209 = vmatprep.subr.bf16.mxu0 0
      %210 = vmatpush1.bf16.msra.mxu0 %v203
      %211 = vmatprep.subr.bf16.mxu0 0
      %212 = vmatpush1.bf16.msra.mxu0 0
      %213 = vmatprep.subr.bf16.mxu0 0
      %214 = vmatpush1.bf16.msra.mxu0 0
      %215 = vmatprep.subr.bf16.mxu0 0
      %216 = vmatpush1.bf16.msra.mxu0 0
      %217 = vmatprep.subr.bf16.mxu0 0
      %218 = vmatpush1.bf16.msra.mxu0 0
      %219 = vmatprep.subr.bf16.mxu0 0
      %220 = vmatpush1.bf16.msra.mxu0 0
      %221 = vmatprep.subr.bf16.mxu0 0
      %222 = vmatpush1.bf16.msra.mxu0 0
      %223 = vmatprep.subr.bf16.mxu0 0
      %224 = vmatpush1.bf16.msra.mxu0 0
      %225 = vmatprep.subr.bf16.mxu0 0
      %226 = vmatpush1.bf16.msra.mxu0 0
      %227 = vmatprep.subr.bf16.mxu0 0
      %228 = vmatpush1.bf16.msra.mxu0 0
      %229 = vmatprep.subr.bf16.mxu0 0
      %230 = vmatpush1.bf16.msra.mxu0 0
      %231 = vmatprep.subr.bf16.mxu0 0
      %232 = vmatpush1.bf16.msra.mxu0 0
      %233 = vmatprep.subr.bf16.mxu0 0
      %234 = vmatpush1.bf16.msra.mxu0 0
      %235 = vmatprep.subr.bf16.mxu0 0
      %236 = vmatpush1.bf16.msra.mxu0 0
      %237 = vmatprep.subr.bf16.mxu0 0
      %238 = vmatpush1.bf16.msra.mxu0 0
      %239 = vmatprep.subr.bf16.mxu0 0
      %240 = vmatpush1.bf16.msra.mxu0 0
      %241 = vmatprep.mubr.bf16.mxu0 0
      %242 = vmatmul.mubr.bf16.gmra.mrb[0].mxu0 %v207
      %v243 = vpop.f32.mrb[0].mxu0
      %v244 = vadd.f32 0.0, %v243
      %v245 = vpop.f32.mrb[0].mxu0
      %v246 = vpop.f32.mrb[0].mxu0
      %v247 = vadd.f32 0.0, %v246
      %v248 = vpop.f32.mrb[0].mxu0
      %249 = vdwg.mxu0
      %v250 = vpack.c.bf16 %v247, %v244
      %v252 = vunpack.c.l.b16 %v250
      %v253 = vunpack.c.h.b16 %v250
      %v254 = vpack.c.b16 %v252, %v252
      %v255 = vpack.c.b16 %v253, %v253
      %vm258 = vcmask 76800
      %259 = vst.msk [vmem:[%s187] sm:$0xf] %vm258, %v254
      %260 = vst.msk [vmem:[%s187 + $0x4] sm:$0xf] %vm258, %v255
      %s261 = smul.u32 2, %s17
      %p262 = scmp.lt.s32.totalorder %s18, 7
      %s263 = scalar_select %p262, %s18, 7
      %p264 = scmp.lt.s32.totalorder %s261, 1
      %s265 = scalar_select %p264, %s261, 1
      %s266 = smul.addr %s263, 2
      %s267 = sadd.s32 %s265, %s266
      %s268 = smul.addr %s267, 4
      %s269 = scalar_lea.vmem %s2, %s268
      // Predicated region
      $region29: #{ogb_gat_forward.5} parent=27 // pred_check
        %p270 = pneg %p97
      $region30: #{ogb_gat_forward.5} parent=27 // pred_check_branch
        %272 = sbr.rel (%p270) target = $region32
      $region31: #{ogb_gat_forward.5} parent=27 // pred_region
        %s273 = smul.u32 2, %s17
      $region32: #{ogb_gat_forward.5} parent=27 // pred_fallthru
        _
    $region28: #{ogb_gat_forward.5} parent=5 // pred_fallthru
      _
    %p274 = scmp.le.s32.totalorder 2, %s8
    // Predicated region
    $region33: #{ogb_gat_forward.5} parent=5 // pred_check
      %p275 = pneg %p274
    $region34: #{ogb_gat_forward.5} parent=5 // pred_check_branch
      %277 = sbr.rel (%p275) target = $region36
    $region35: #{ogb_gat_forward.5} parent=5 // pred_region
      %s278 = ssub.s32 %s8, 2
      // Predicated region
      $region37: #{ogb_gat_forward.5} parent=35 // pred_check
        %p279 = pneg %p103
      $region38: #{ogb_gat_forward.5} parent=35 // pred_check_branch
        %281 = sbr.rel (%p279) target = $region40
      $region39: #{ogb_gat_forward.5} parent=35 // pred_region
        %s282 = smul.u32 2, %s19
        %p283 = scmp.lt.s32.totalorder %s20, 7
        %s284 = scalar_select %p283, %s20, 7
        %p285 = scmp.lt.s32.totalorder %s282, 1
        %s286 = scalar_select %p285, %s282, 1
        %s287 = smul.addr %s284, 2
        %s288 = sadd.s32 %s286, %s287
        %s289 = smul.addr %s288, 4
        %s290 = scalar_lea.vmem %s2, %s289
      $region40: #{ogb_gat_forward.5} parent=35 // pred_fallthru
        _
    $region36: #{ogb_gat_forward.5} parent=5 // pred_fallthru
      _
  $region6: #{ogb_gat_forward.5} parent=0 // loop_footer
    %s12 = sadd.s32 1, %s8
  $region7: #{ogb_gat_forward.5} parent=0 // loop_footer_branch
    %7 = sbr.rel target = $region3
  $region8: #{ogb_gat_forward.5} parent=0 // loop_exit
    _

// kernel: ogb_gat_forward.7
$region0: #{ogb_gat_forward.7}
  #allocation0 [shape = 'u32[]', space=smem, size = 0x4, offset = 0x4, fixed_abs, tag = 'smem constant byte address 0x4 - core index']
  #allocation1 [shape = 'u32[144,128]{1,0:T(1,128)}', space=vmem, size = 0x12000, scoped, tag = 'internal scratch']
  %s0 = inlined_call_operand.vmem [shape: f32[4,16,8], index: 0, kind: input, shape index: {}]
  %s1 = inlined_call_operand.vmem [shape: bf16[16,32], index: 1, kind: output, shape index: {}]
  %s2 = sld [smem:[#allocation0]]
  $region14: #{ogb_gat_forward.7} parent=0
    _
  %s4 = ssub.s32 1, %s2
  %s5 = scalar_select 0, %s4, %s2
  // Predicated region
  $region2: #{ogb_gat_forward.7} parent=0 // pred_check
    _
  $region3: #{ogb_gat_forward.7} parent=0 // pred_check_branch
    %7 = sbr.rel (0) target = $region5
  $region4: #{ogb_gat_forward.7} parent=0 // pred_region
    _
  $region5: #{ogb_gat_forward.7} parent=0 // pred_fallthru
    _
  %v8 = vld [vmem:[%s0] sm:$0xff]
  %v9 = vld [vmem:[%s0 + $0x8] sm:$0xff]
  %v10 = vld [vmem:[%s0 + $0x10] sm:$0xff]
  %v11 = vld [vmem:[%s0 + $0x18] sm:$0xff]
  %v12 = vld [vmem:[%s0 + $0x20] sm:$0xff]
  %v13 = vld [vmem:[%s0 + $0x28] sm:$0xff]
  %v14 = vld [vmem:[%s0 + $0x30] sm:$0xff]
  %v15 = vld [vmem:[%s0 + $0x38] sm:$0xff]
  %vm16 = vcmask 64512
  %v17 = vsel %vm16, %v8, 0.0
  %v18 = vsel %vm16, %v9, 0.0
  %v19 = vadd.f32 %v17, %v18
  %v20 = vrot.slane %v19, 4
  %v21 = vadd.f32 %v19, %v20
  %v22 = vrot.slane %v21, 2
  %v23 = vadd.f32 %v21, %v22
  %v24 = vrot.slane %v23, 1
  %v25 = vadd.f32 %v23, %v24
  %v26 = vsel %vm16, %v10, 0.0
  %v27 = vsel %vm16, %v11, 0.0
  %v28 = vadd.f32 %v26, %v27
  %v29 = vrot.slane %v28, 4
  %v30 = vadd.f32 %v28, %v29
  %v31 = vrot.slane %v30, 2
  %v32 = vadd.f32 %v30, %v31
  %v33 = vrot.slane %v32, 1
  %v34 = vadd.f32 %v32, %v33
  %v35 = vsel %vm16, %v12, 0.0
  %v36 = vsel %vm16, %v13, 0.0
  %v37 = vadd.f32 %v35, %v36
  %v38 = vrot.slane %v37, 4
  %v39 = vadd.f32 %v37, %v38
  %v40 = vrot.slane %v39, 2
  %v41 = vadd.f32 %v39, %v40
  %v42 = vrot.slane %v41, 1
  %v43 = vadd.f32 %v41, %v42
  %v44 = vsel %vm16, %v14, 0.0
  %v45 = vsel %vm16, %v15, 0.0
  %v46 = vadd.f32 %v44, %v45
  %v47 = vrot.slane %v46, 4
  %v48 = vadd.f32 %v46, %v47
  %v49 = vrot.slane %v48, 2
  %v50 = vadd.f32 %v48, %v49
  %v51 = vrot.slane %v50, 1
  %v52 = vadd.f32 %v50, %v51
  %v53 = vrcp.pop 16.0
  %v54 = vmul.f32 %v25, %v53
  %v55 = vmul.f32 %v34, %v53
  %v56 = vmul.f32 %v43, %v53
  %v57 = vmul.f32 %v52, %v53
  %v58 = vsub.f32 %v8, %v54
  %v59 = vsub.f32 %v9, %v54
  %v60 = vsub.f32 %v10, %v55
  %v61 = vsub.f32 %v11, %v55
  %v62 = vsub.f32 %v12, %v56
  %v63 = vsub.f32 %v13, %v56
  %v64 = vsub.f32 %v14, %v57
  %v65 = vsub.f32 %v15, %v57
  %v66 = vmul.f32 %v58, %v58
  %v67 = vmul.f32 %v59, %v59
  %v68 = vmul.f32 %v60, %v60
  %v69 = vmul.f32 %v61, %v61
  %v70 = vmul.f32 %v62, %v62
  %v71 = vmul.f32 %v63, %v63
  %v72 = vmul.f32 %v64, %v64
  %v73 = vmul.f32 %v65, %v65
  %v74 = vsel %vm16, %v66, 0.0
  %v75 = vsel %vm16, %v67, 0.0
  %v76 = vadd.f32 %v74, %v75
  %v77 = vrot.slane %v76, 4
  %v78 = vadd.f32 %v76, %v77
  %v79 = vrot.slane %v78, 2
  %v80 = vadd.f32 %v78, %v79
  %v81 = vrot.slane %v80, 1
  %v82 = vadd.f32 %v80, %v81
  %v83 = vsel %vm16, %v68, 0.0
  %v84 = vsel %vm16, %v69, 0.0
  %v85 = vadd.f32 %v83, %v84
  %v86 = vrot.slane %v85, 4
  %v87 = vadd.f32 %v85, %v86
  %v88 = vrot.slane %v87, 2
  %v89 = vadd.f32 %v87, %v88
  %v90 = vrot.slane %v89, 1
  %v91 = vadd.f32 %v89, %v90
  %v92 = vsel %vm16, %v70, 0.0
  %v93 = vsel %vm16, %v71, 0.0
  %v94 = vadd.f32 %v92, %v93
  %v95 = vrot.slane %v94, 4
  %v96 = vadd.f32 %v94, %v95
  %v97 = vrot.slane %v96, 2
  %v98 = vadd.f32 %v96, %v97
  %v99 = vrot.slane %v98, 1
  %v100 = vadd.f32 %v98, %v99
  %v101 = vsel %vm16, %v72, 0.0
  %v102 = vsel %vm16, %v73, 0.0
  %v103 = vadd.f32 %v101, %v102
  %v104 = vrot.slane %v103, 4
  %v105 = vadd.f32 %v103, %v104
  %v106 = vrot.slane %v105, 2
  %v107 = vadd.f32 %v105, %v106
  %v108 = vrot.slane %v107, 1
  %v109 = vadd.f32 %v107, %v108
  %v110 = vmul.f32 %v82, %v53
  %v111 = vmul.f32 %v91, %v53
  %v112 = vmul.f32 %v100, %v53
  %v113 = vmul.f32 %v109, %v53
  %v114 = vadd.f32 %v110, 1e-05
  %v115 = vadd.f32 %v111, 1e-05
  %v116 = vadd.f32 %v112, 1e-05
  %v117 = vadd.f32 %v113, 1e-05
  %v118 = vrsqrt.pop %v114
  %v119 = vrsqrt.pop %v115
  %v120 = vrsqrt.pop %v116
  %v121 = vrsqrt.pop %v117
  %v122 = vmul.f32 %v58, %v118
  %v123 = vmul.f32 %v59, %v118
  %v124 = vmul.f32 %v60, %v119
  %v125 = vmul.f32 %v61, %v119
  %v126 = vmul.f32 %v62, %v120
  %v127 = vmul.f32 %v63, %v120
  %v128 = vmul.f32 %v64, %v121
  %v129 = vmul.f32 %v65, %v121
  %v130 = vmax.f32 %v122, 0.0
  %v131 = vmax.f32 %v123, 0.0
  %v132 = vmax.f32 %v124, 0.0
  %v133 = vmax.f32 %v125, 0.0
  %v134 = vmax.f32 %v126, 0.0
  %v135 = vmax.f32 %v127, 0.0
  %v136 = vmax.f32 %v128, 0.0
  %v137 = vmax.f32 %v129, 0.0
  %140 = vrot.lane.b32.xlu0 %v132, 8
  %v141 = vpop.permute.xlu0 %140
  %142 = vrot.lane.b32.xlu0 %v133, 8
  %v143 = vpop.permute.xlu0 %142
  %148 = vrot.lane.b32.xlu0 %v134, 16
  %v149 = vpop.permute.xlu0 %148
  %150 = vrot.lane.b32.xlu0 %v135, 16
  %v151 = vpop.permute.xlu0 %150
  %156 = vrot.lane.b32.xlu0 %v136, 24
  %v157 = vpop.permute.xlu0 %156
  %158 = vrot.lane.b32.xlu0 %v137, 24
  %v159 = vpop.permute.xlu0 %158
  %v162 = vsel %vm16, %v130, %v141
  %v163 = vsel %vm16, %v131, %v143
  %vm164 = vcmask 130048
  %v165 = vsel %vm164, %v162, %v149
  %v166 = vsel %vm164, %v163, %v151
  %vm167 = vcmask 195584
  %v168 = vsel %vm167, %v165, %v157
  %v169 = vsel %vm167, %v166, %v159
  %v170 = vpack.c.bf16 %v169, %v168
  %v172 = vunpack.c.l.b16 %v170
  %v173 = vunpack.c.h.b16 %v170
  %v174 = vpack.c.b16 %v172, %v172
  %v175 = vpack.c.b16 %v173, %v173
  %vm178 = vcmask 257024
  %179 = vst.msk [vmem:[%s1] sm:$0xf] %vm178, %v174
  %180 = vst.msk [vmem:[%s1 + $0x4] sm:$0xf] %vm178, %v175
  // Predicated region
  $region6: #{ogb_gat_forward.7} parent=0 // pred_check
    _
  $region7: #{ogb_gat_forward.7} parent=0 // pred_check_branch
    %182 = sbr.rel (0) target = $region9
  $region8: #{ogb_gat_forward.7} parent=0 // pred_region
    _
  $region9: #{ogb_gat_forward.7} parent=0 // pred_fallthru
    _
  // Predicated region
  $region10: #{ogb_gat_forward.7} parent=0 // pred_check
    _
  $region11: #{ogb_gat_forward.7} parent=0 // pred_check_branch
    %184 = sbr.rel (0) target = $region13
  $region12: #{ogb_gat_forward.7} parent=0 // pred_region
    _
  $region13: #{ogb_gat_forward.7} parent=0 // pred_fallthru
    _

// kernel: ogb_gat_forward.8
$region0: #{ogb_gat_forward.8}
  #allocation0 [shape = 'u32[]', space=smem, size = 0x4, offset = 0x4, fixed_abs, tag = 'smem constant byte address 0x4 - core index']
  #allocation1 [shape = 'u32[144,128]{1,0:T(1,128)}', space=vmem, size = 0x12000, scoped, tag = 'internal scratch']
  %s0 = inlined_call_operand.vmem [shape: bf16[16,32], index: 0, kind: input, shape index: {}]
  %s1 = inlined_call_operand.vmem [shape: bf16[8,32,6], index: 1, kind: input, shape index: {}]
  %s2 = inlined_call_operand.vmem [shape: bf16[8,16,6], index: 2, kind: output, shape index: {}]
  %s3 = sld [smem:[#allocation0]]
  $region41: #{ogb_gat_forward.8} parent=0
    _
  %s5 = ssub.s32 1, %s3
  %s6 = scalar_select 0, %s5, %s3
  loop: start=0, step=1, limit=10
  $region2: #{ogb_gat_forward.8} parent=0 // loop_pre_header
    _
  $region3: #{ogb_gat_forward.8} parent=0 // loop_header
    %s8 = sphi 0, %s12
    %p9 = scmp.ge.s32.totalorder %s8, 10
    %s15 = sphi 0, %s27
    %s16 = sphi 0, %s23
    %s17 = sphi 0, %s15
    %s18 = sphi 0, %s16
    %s19 = sphi 0, %s17
    %s20 = sphi 0, %s18
    %s30 = sphi 0, %s32
    %s33 = sphi 0, %s30
    %s34 = sphi 0, %s33
    %s50 = sphi 0, %s34
    %s56 = sphi 0, %s58
    %s59 = sphi 0, %s56
    %s60 = sphi 0, %s59
    %s76 = sphi 0, %s60
    %s84 = sphi 0, %s86
    %s87 = sphi 0, %s84
    %s88 = sphi 0, %s87
    %s104 = sphi 0, %s88
  $region4: #{ogb_gat_forward.8} parent=0 // loop_header_branch
    %11 = sbr.rel (%p9) target = $region8
  $region5: #{ogb_gat_forward.8} parent=0 // loop_body
    %s13 = ssub.s32 %s8, 1
    %s14 = ssub.s32 %s8, 2
    %s21 = sadd.s32 1, %s16
    %p22 = scmp.ge.s32.totalorder %s21, 8
    %s23 = scalar_select %p22, 0, %s21
    %s24 = sadd.s32 1, %s15
    %s25 = scalar_select %p22, %s24, %s15
    %p26 = scmp.ge.s32.totalorder %s25, 1
    %s27 = scalar_select %p26, 0, %s25
    %s28 = ssub.s32 %s15, %s27
    %p29 = scmp.eq.s32.totalorder %s28, 0
    %s31 = sadd.s32 %s30, 1
    %s32 = scalar_select %p29, %s30, %s31
    %p35 = pneg %p29
    %p36 = scmp.eq.s32.totalorder %s8, 7
    %p37 = por %p35, %p36
    %p38 = scmp.ne.s32.totalorder %s30, %s33
    %p39 = scmp.eq.s32.totalorder %s8, 0
    %p40 = por %p38, %p39
    %p41 = scmp.ne.s32.totalorder %s30, %s33
    %p42 = scmp.eq.s32.totalorder %s13, 7
    %p43 = por %p41, %p42
    %p44 = scmp.ne.s32.totalorder %s33, %s34
    %p45 = scmp.eq.s32.totalorder %s13, 0
    %p46 = por %p44, %p45
    %p47 = scmp.ne.s32.totalorder %s33, %s34
    %p48 = scmp.eq.s32.totalorder %s14, 7
    %p49 = por %p47, %p48
    %p51 = scmp.ne.s32.totalorder %s34, %s50
    %p52 = scmp.eq.s32.totalorder %s14, 0
    %p53 = por %p51, %p52
    %s54 = ssub.s32 %s16, %s23
    %p55 = scmp.eq.s32.totalorder %s54, 0
    %s57 = sadd.s32 %s56, 1
    %s58 = scalar_select %p55, %s56, %s57
    %p61 = pneg %p55
    %p62 = scmp.eq.s32.totalorder %s8, 7
    %p63 = por %p61, %p62
    %p64 = scmp.ne.s32.totalorder %s56, %s59
    %p65 = scmp.eq.s32.totalorder %s8, 0
    %p66 = por %p64, %p65
    %p67 = scmp.ne.s32.totalorder %s56, %s59
    %p68 = scmp.eq.s32.totalorder %s13, 7
    %p69 = por %p67, %p68
    %p70 = scmp.ne.s32.totalorder %s59, %s60
    %p71 = scmp.eq.s32.totalorder %s13, 0
    %p72 = por %p70, %p71
    %p73 = scmp.ne.s32.totalorder %s59, %s60
    %p74 = scmp.eq.s32.totalorder %s14, 7
    %p75 = por %p73, %p74
    %p77 = scmp.ne.s32.totalorder %s60, %s76
    %p78 = scmp.eq.s32.totalorder %s14, 0
    %p79 = por %p77, %p78
    %s80 = ssub.s32 %s16, %s23
    %s81 = ssub.s32 %s15, %s27
    %s82 = sor.u32 %s80, %s81
    %p83 = scmp.eq.s32.totalorder %s82, 0
    %s85 = sadd.s32 %s84, 1
    %s86 = scalar_select %p83, %s84, %s85
    %p89 = pneg %p83
    %p90 = scmp.eq.s32.totalorder %s8, 7
    %p91 = por %p89, %p90
    %p92 = scmp.ne.s32.totalorder %s84, %s87
    %p93 = scmp.eq.s32.totalorder %s8, 0
    %p94 = por %p92, %p93
    %p95 = scmp.ne.s32.totalorder %s84, %s87
    %p96 = scmp.eq.s32.totalorder %s13, 7
    %p97 = por %p95, %p96
    %p98 = scmp.ne.s32.totalorder %s87, %s88
    %p99 = scmp.eq.s32.totalorder %s13, 0
    %p100 = por %p98, %p99
    %p101 = scmp.ne.s32.totalorder %s87, %s88
    %p102 = scmp.eq.s32.totalorder %s14, 7
    %p103 = por %p101, %p102
    %p105 = scmp.ne.s32.totalorder %s88, %s104
    %p106 = scmp.eq.s32.totalorder %s14, 0
    %p107 = por %p105, %p106
    %p108 = scmp.le.s32.totalorder 1, %s8
    %p109 = scmp.lt.s32.totalorder %s8, 9
    %p110 = pnand %p108, %p109
    %p111 = pneg %p110
    // Predicated region
    $region9: #{ogb_gat_forward.8} parent=5 // pred_check
      _
    $region10: #{ogb_gat_forward.8} parent=5 // pred_check_branch
      %113 = sbr.rel (%p110) target = $region12
    $region11: #{ogb_gat_forward.8} parent=5 // pred_region
      %s114 = ssub.s32 %s8, 1
      // Predicated region
      $region13: #{ogb_gat_forward.8} parent=11 // pred_check
        %p115 = pneg %p46
      $region14: #{ogb_gat_forward.8} parent=11 // pred_check_branch
        %117 = sbr.rel (%p115) target = $region16
      $region15: #{ogb_gat_forward.8} parent=11 // pred_region
        %s118 = smul.u32 2, %s17
        %p119 = scmp.lt.s32.totalorder %s118, 1
        %s120 = scalar_select %p119, %s118, 1
        %s121 = smul.addr %s120, 4
        %s122 = scalar_lea.vmem %s0, %s121
        %s123 = smul.u32 2, %s17
      $region16: #{ogb_gat_forward.8} parent=11 // pred_fallthru
        _
    $region12: #{ogb_gat_forward.8} parent=5 // pred_fallthru
      _
    %p124 = scmp.lt.s32.totalorder %s8, 8
    // Predicated region
    $region17: #{ogb_gat_forward.8} parent=5 // pred_check
      %p125 = pneg %p124
    $region18: #{ogb_gat_forward.8} parent=5 // pred_check_branch
      %127 = sbr.rel (%p125) target = $region20
    $region19: #{ogb_gat_forward.8} parent=5 // pred_region
      // Predicated region
      $region21: #{ogb_gat_forward.8} parent=19 // pred_check
        %p128 = pneg %p66
      $region22: #{ogb_gat_forward.8} parent=19 // pred_check_branch
        %130 = sbr.rel (%p128) target = $region24
      $region23: #{ogb_gat_forward.8} parent=19 // pred_region
        %p131 = scmp.lt.s32.totalorder %s16, 7
        %s132 = scalar_select %p131, %s16, 7
        %s133 = smul.addr %s132, 4
        %s134 = smul.addr %s133, 4
        %s135 = scalar_lea.vmem %s1, %s134
      $region24: #{ogb_gat_forward.8} parent=19 // pred_fallthru
        _
    $region20: #{ogb_gat_forward.8} parent=5 // pred_fallthru
      _
    %p136 = scmp.le.s32.totalorder 1, %s8
    %p137 = scmp.lt.s32.totalorder %s8, 9
    %p138 = pnand %p136, %p137
    %p139 = pneg %p138
    // Predicated region
    $region25: #{ogb_gat_forward.8} parent=5 // pred_check
      _
    $region26: #{ogb_gat_forward.8} parent=5 // pred_check_branch
      %141 = sbr.rel (%p138) target = $region28
    $region27: #{ogb_gat_forward.8} parent=5 // pred_region
      %s142 = ssub.s32 %s8, 1
      %s143 = smul.u32 2, %s17
      %p144 = scmp.lt.s32.totalorder %s143, 1
      %s145 = scalar_select %p144, %s143, 1
      %s146 = smul.addr %s145, 4
      %s147 = scalar_lea.vmem %s0, %s146
      %p148 = pneg %p46
      %p149 = pneg %p43
      %p150 = scmp.lt.s32.totalorder %s18, 7
      %s151 = scalar_select %p150, %s18, 7
      %s152 = smul.addr %s151, 4
      %s153 = smul.addr %s152, 4
      %s154 = scalar_lea.vmem %s1, %s153
      %p155 = pneg %p72
      %p156 = pneg %p69
      %p157 = pneg %p100
      %p158 = pneg %p97
      %s159 = smul.u32 2, %s17
      %p160 = scmp.lt.s32.totalorder %s18, 7
      %s161 = scalar_select %p160, %s18, 7
      %p162 = scmp.lt.s32.totalorder %s159, 1
      %s163 = scalar_select %p162, %s159, 1
      %s164 = smul.addr %s161, 2
      %s165 = sadd.s32 %s163, %s164
      %s166 = smul.addr %s165, 4
      %s167 = scalar_lea.vmem %s2, %s166
      %s168 = smul.u32 2, %s17
      %p169 = scmp.lt.s32.totalorder %s168, 1
      %s170 = scalar_select %p169, %s168, 1
      %s171 = smul.addr %s170, 4
      %s172 = scalar_lea.vmem %s0, %s171
      %s173 = smul.u32 2, %s17
      %p174 = scmp.lt.s32.totalorder %s18, 7
      %s175 = scalar_select %p174, %s18, 7
      %s176 = smul.addr %s175, 4
      %s177 = smul.addr %s176, 4
      %s178 = scalar_lea.vmem %s1, %s177
      %s179 = smul.u32 2, %s17
      %p180 = scmp.lt.s32.totalorder %s18, 7
      %s181 = scalar_select %p180, %s18, 7
      %p182 = scmp.lt.s32.totalorder %s179, 1
      %s183 = scalar_select %p182, %s179, 1
      %s184 = smul.addr %s181, 2
      %s185 = sadd.s32 %s183, %s184
      %s186 = smul.addr %s185, 4
      %s187 = scalar_lea.vmem %s2, %s186
      %s188 = smul.u32 2, %s17
      %v190 = vld [vmem:[%s172] sm:$0xf]
      %v191 = vld [vmem:[%s172 + $0x4] sm:$0xf]
      %v192 = vld [vmem:[%s178] sm:$0xf]
      %v193 = vld [vmem:[%s178 + $0x4] sm:$0xf]
      %v194 = vld [vmem:[%s178 + $0x8] sm:$0xf]
      %v195 = vld [vmem:[%s178 + $0xc] sm:$0xf]
      %v198 = vunpack.c.l.b16 %v190
      %v199 = vunpack.c.l.b16 %v191
      %v200 = vpack.c.b16 %v199, %v198
      %v205 = vunpack.c.l.b16 %v192
      %v206 = vunpack.c.l.b16 %v193
      %v207 = vunpack.c.l.b16 %v194
      %v208 = vunpack.c.l.b16 %v195
      %v209 = vpack.c.b16 %v206, %v205
      %v210 = vpack.c.b16 %v208, %v207
      %vm213 = vcmask 261120
      %v215 = vsel %vm213, %v200, 0
      %217 = vmatprep.subr.bf16.mxu0 0
      %218 = vmatpush1.bf16.msra.mxu0 %v209
      %219 = vmatprep.subr.bf16.mxu0 0
      %220 = vmatpush1.bf16.msra.mxu0 %v210
      %221 = vmatprep.subr.bf16.mxu0 0
      %222 = vmatpush1.bf16.msra.mxu0 0
      %223 = vmatprep.subr.bf16.mxu0 0
      %224 = vmatpush1.bf16.msra.mxu0 0
      %225 = vmatprep.subr.bf16.mxu0 0
      %226 = vmatpush1.bf16.msra.mxu0 0
      %227 = vmatprep.subr.bf16.mxu0 0
      %228 = vmatpush1.bf16.msra.mxu0 0
      %229 = vmatprep.subr.bf16.mxu0 0
      %230 = vmatpush1.bf16.msra.mxu0 0
      %231 = vmatprep.subr.bf16.mxu0 0
      %232 = vmatpush1.bf16.msra.mxu0 0
      %233 = vmatprep.subr.bf16.mxu0 0
      %234 = vmatpush1.bf16.msra.mxu0 0
      %235 = vmatprep.subr.bf16.mxu0 0
      %236 = vmatpush1.bf16.msra.mxu0 0
      %237 = vmatprep.subr.bf16.mxu0 0
      %238 = vmatpush1.bf16.msra.mxu0 0
      %239 = vmatprep.subr.bf16.mxu0 0
      %240 = vmatpush1.bf16.msra.mxu0 0
      %241 = vmatprep.subr.bf16.mxu0 0
      %242 = vmatpush1.bf16.msra.mxu0 0
      %243 = vmatprep.subr.bf16.mxu0 0
      %244 = vmatpush1.bf16.msra.mxu0 0
      %245 = vmatprep.subr.bf16.mxu0 0
      %246 = vmatpush1.bf16.msra.mxu0 0
      %247 = vmatprep.subr.bf16.mxu0 0
      %248 = vmatpush1.bf16.msra.mxu0 0
      %249 = vmatprep.mubr.bf16.mxu0 0
      %250 = vmatmul.mubr.bf16.gmra.mrb[0].mxu0 %v215
      %v251 = vpop.f32.mrb[0].mxu0
      %v252 = vadd.f32 0.0, %v251
      %v253 = vpop.f32.mrb[0].mxu0
      %v254 = vpop.f32.mrb[0].mxu0
      %v255 = vadd.f32 0.0, %v254
      %v256 = vpop.f32.mrb[0].mxu0
      %257 = vdwg.mxu0
      %v258 = vpack.c.bf16 %v255, %v252
      %v260 = vunpack.c.l.b16 %v258
      %v261 = vunpack.c.h.b16 %v258
      %v262 = vpack.c.b16 %v260, %v260
      %v263 = vpack.c.b16 %v261, %v261
      %vm266 = vcmask 44032
      %267 = vst.msk [vmem:[%s187] sm:$0xf] %vm266, %v262
      %268 = vst.msk [vmem:[%s187 + $0x4] sm:$0xf] %vm266, %v263
      %s269 = smul.u32 2, %s17
      %p270 = scmp.lt.s32.totalorder %s18, 7
      %s271 = scalar_select %p270, %s18, 7
      %p272 = scmp.lt.s32.totalorder %s269, 1
      %s273 = scalar_select %p272, %s269, 1
      %s274 = smul.addr %s271, 2
      %s275 = sadd.s32 %s273, %s274
      %s276 = smul.addr %s275, 4
      %s277 = scalar_lea.vmem %s2, %s276
      // Predicated region
      $region29: #{ogb_gat_forward.8} parent=27 // pred_check
        %p278 = pneg %p97
      $region30: #{ogb_gat_forward.8} parent=27 // pred_check_branch
        %280 = sbr.rel (%p278) target = $region32
      $region31: #{ogb_gat_forward.8} parent=27 // pred_region
        %s281 = smul.u32 2, %s17
      $region32: #{ogb_gat_forward.8} parent=27 // pred_fallthru
        _
    $region28: #{ogb_gat_forward.8} parent=5 // pred_fallthru
      _
    %p282 = scmp.le.s32.totalorder 2, %s8
    // Predicated region
    $region33: #{ogb_gat_forward.8} parent=5 // pred_check
      %p283 = pneg %p282
    $region34: #{ogb_gat_forward.8} parent=5 // pred_check_branch
      %285 = sbr.rel (%p283) target = $region36
    $region35: #{ogb_gat_forward.8} parent=5 // pred_region
      %s286 = ssub.s32 %s8, 2
      // Predicated region
      $region37: #{ogb_gat_forward.8} parent=35 // pred_check
        %p287 = pneg %p103
      $region38: #{ogb_gat_forward.8} parent=35 // pred_check_branch
        %289 = sbr.rel (%p287) target = $region40
      $region39: #{ogb_gat_forward.8} parent=35 // pred_region
        %s290 = smul.u32 2, %s19
        %p291 = scmp.lt.s32.totalorder %s20, 7
        %s292 = scalar_select %p291, %s20, 7
        %p293 = scmp.lt.s32.totalorder %s290, 1
        %s294 = scalar_select %p293, %s290, 1
        %s295 = smul.addr %s292, 2
        %s296 = sadd.s32 %s294, %s295
        %s297 = smul.addr %s296, 4
        %s298 = scalar_lea.vmem %s2, %s297
      $region40: #{ogb_gat_forward.8} parent=35 // pred_fallthru
        _
    $region36: #{ogb_gat_forward.8} parent=5 // pred_fallthru
      _
  $region6: #{ogb_gat_forward.8} parent=0 // loop_footer
    %s12 = sadd.s32 1, %s8
  $region7: #{ogb_gat_forward.8} parent=0 // loop_footer_branch
    %7 = sbr.rel target = $region3
  $region8: #{ogb_gat_forward.8} parent=0 // loop_exit
    _

// kernel: ogb_gat_forward.9
$region0: #{ogb_gat_forward.9}
  #allocation0 [shape = 'u32[]', space=smem, size = 0x4, offset = 0x4, fixed_abs, tag = 'smem constant byte address 0x4 - core index']
  #allocation1 [shape = 'u32[144,128]{1,0:T(1,128)}', space=vmem, size = 0x12000, scoped, tag = 'internal scratch']
  %s0 = inlined_call_operand.vmem [shape: bf16[8,16,6], index: 0, kind: input, shape index: {}, may-alias: {0,1}]
  %s1 = inlined_call_operand.vmem [shape: bf16[8,16,6], index: 1, kind: input, shape index: {}, may-alias: {0,1}]
  %s2 = inlined_call_operand.vmem [shape: bf16[16,16], index: 2, kind: input, shape index: {}]
  %s3 = inlined_call_operand.vmem [shape: f32[1,4], index: 3, kind: input, shape index: {}]
  %s4 = inlined_call_operand.vmem [shape: f32[16,4], index: 4, kind: output, shape index: {0}]
  %s5 = inlined_call_operand.hbm [shape: f32[4,16,16], index: 5, kind: output, shape index: {1}]
  %6 = xla_tuple %s4, %s5
  %s7 = sld [smem:[#allocation0]]
  $region65: #{ogb_gat_forward.9} parent=0
    _
  %s9 = ssub.s32 1, %s7
  %s10 = scalar_select 0, %s9, %s7
  $region1: #{ogb_gat_forward.9} parent=0
    #allocation2 [shape = 'u8[16384]{0}', space=vmem, size = 0x4000, scoped, tag = 'output window, operand 1']
    #allocation3 [shape = 's32[2]{0}', space=sflag, size = 0x8, scoped, tag = 'scoped memory for ogb_gat_forward.9']
    %11 = vsyncpa [#allocation3], 0
    %s12 = scalar_lea.sflag [#allocation3], 1
    %13 = vsyncpa %s12, 0
    loop: start=0, step=1, limit=6
    $region2: #{ogb_gat_forward.9} parent=1 // loop_pre_header
      _
    $region3: #{ogb_gat_forward.9} parent=1 // loop_header
      %s15 = sphi 0, %s19
      %p16 = scmp.ge.s32.totalorder %s15, 6
      %s22 = sphi 0, %s34
      %s23 = sphi 0, %s30
      %s24 = sphi 0, %s22
      %s25 = sphi 0, %s23
      %s26 = sphi 0, %s24
      %s27 = sphi 0, %s25
      %s37 = sphi 0, %s39
      %s40 = sphi 0, %s37
      %s41 = sphi 0, %s40
      %s57 = sphi 0, %s41
      %s67 = sphi 0, %s69
      %s70 = sphi 0, %s67
      %s71 = sphi 0, %s70
      %s87 = sphi 0, %s71
      %s93 = sphi 0, %s95
      %s96 = sphi 0, %s93
      %s97 = sphi 0, %s96
      %s113 = sphi 0, %s97
      %s117 = sphi 0, %s117
      %s119 = sphi 0, %s117
      %s120 = sphi 0, %s119
      %s134 = sphi 0, %s120
      %s140 = sphi 0, %s142
      %s143 = sphi 0, %s140
      %s144 = sphi 0, %s143
      %s160 = sphi 0, %s144
      %s168 = sphi 0, %s170
      %s171 = sphi 0, %s168
      %s172 = sphi 0, %s171
      %s188 = sphi 0, %s172
    $region4: #{ogb_gat_forward.9} parent=1 // loop_header_branch
      %18 = sbr.rel (%p16) target = $region8
    $region5: #{ogb_gat_forward.9} parent=1 // loop_body
      %s20 = ssub.s32 %s15, 1
      %s21 = ssub.s32 %s15, 2
      %s28 = sadd.s32 1, %s23
      %p29 = scmp.ge.s32.totalorder %s28, 4
      %s30 = scalar_select %p29, 0, %s28
      %s31 = sadd.s32 1, %s22
      %s32 = scalar_select %p29, %s31, %s22
      %p33 = scmp.ge.s32.totalorder %s32, 1
      %s34 = scalar_select %p33, 0, %s32
      %s35 = ssub.s32 %s23, %s30
      %p36 = scmp.eq.s32.totalorder %s35, 0
      %s38 = sadd.s32 %s37, 1
      %s39 = scalar_select %p36, %s37, %s38
      %p42 = pneg %p36
      %p43 = scmp.eq.s32.totalorder %s15, 3
      %p44 = por %p42, %p43
      %p45 = scmp.ne.s32.totalorder %s37, %s40
      %p46 = scmp.eq.s32.totalorder %s15, 0
      %p47 = por %p45, %p46
      %p48 = scmp.ne.s32.totalorder %s37, %s40
      %p49 = scmp.eq.s32.totalorder %s20, 3
      %p50 = por %p48, %p49
      %p51 = scmp.ne.s32.totalorder %s40, %s41
      %p52 = scmp.eq.s32.totalorder %s20, 0
      %p53 = por %p51, %p52
      %p54 = scmp.ne.s32.totalorder %s40, %s41
      %p55 = scmp.eq.s32.totalorder %s21, 3
      %p56 = por %p54, %p55
      %p58 = scmp.ne.s32.totalorder %s41, %s57
      %p59 = scmp.eq.s32.totalorder %s21, 0
      %p60 = por %p58, %p59
      %s61 = sadd.s32 %s23, 4
      %s62 = sadd.s32 %s30, 4
      %s63 = ssub.s32 %s61, %s62
      %s64 = ssub.s32 %s22, %s34
      %s65 = sor.u32 %s63, %s64
      %p66 = scmp.eq.s32.totalorder %s65, 0
      %s68 = sadd.s32 %s67, 1
      %s69 = scalar_select %p66, %s67, %s68
      %p72 = pneg %p66
      %p73 = scmp.eq.s32.totalorder %s15, 3
      %p74 = por %p72, %p73
      %p75 = scmp.ne.s32.totalorder %s67, %s70
      %p76 = scmp.eq.s32.totalorder %s15, 0
      %p77 = por %p75, %p76
      %p78 = scmp.ne.s32.totalorder %s67, %s70
      %p79 = scmp.eq.s32.totalorder %s20, 3
      %p80 = por %p78, %p79
      %p81 = scmp.ne.s32.totalorder %s70, %s71
      %p82 = scmp.eq.s32.totalorder %s20, 0
      %p83 = por %p81, %p82
      %p84 = scmp.ne.s32.totalorder %s70, %s71
      %p85 = scmp.eq.s32.totalorder %s21, 3
      %p86 = por %p84, %p85
      %p88 = scmp.ne.s32.totalorder %s71, %s87
      %p89 = scmp.eq.s32.totalorder %s21, 0
      %p90 = por %p88, %p89
      %s91 = ssub.s32 %s22, %s34
      %p92 = scmp.eq.s32.totalorder %s91, 0
      %s94 = sadd.s32 %s93, 1
      %s95 = scalar_select %p92, %s93, %s94
      %p98 = pneg %p92
      %p99 = scmp.eq.s32.totalorder %s15, 3
      %p100 = por %p98, %p99
      %p101 = scmp.ne.s32.totalorder %s93, %s96
      %p102 = scmp.eq.s32.totalorder %s15, 0
      %p103 = por %p101, %p102
      %p104 = scmp.ne.s32.totalorder %s93, %s96
      %p105 = scmp.eq.s32.totalorder %s20, 3
      %p106 = por %p104, %p105
      %p107 = scmp.ne.s32.totalorder %s96, %s97
      %p108 = scmp.eq.s32.totalorder %s20, 0
      %p109 = por %p107, %p108
      %p110 = scmp.ne.s32.totalorder %s96, %s97
      %p111 = scmp.eq.s32.totalorder %s21, 3
      %p112 = por %p110, %p111
      %p114 = scmp.ne.s32.totalorder %s97, %s113
      %p115 = scmp.eq.s32.totalorder %s21, 0
      %p116 = por %p114, %p115
      %s118 = sadd.s32 %s117, 1
      %p121 = scmp.eq.s32.totalorder %s15, 3
      %p122 = scmp.ne.s32.totalorder %s117, %s119
      %p123 = scmp.eq.s32.totalorder %s15, 0
      %p124 = por %p122, %p123
      %p125 = scmp.ne.s32.totalorder %s117, %s119
      %p126 = scmp.eq.s32.totalorder %s20, 3
      %p127 = por %p125, %p126
      %p128 = scmp.ne.s32.totalorder %s119, %s120
      %p129 = scmp.eq.s32.totalorder %s20, 0
      %p130 = por %p128, %p129
      %p131 = scmp.ne.s32.totalorder %s119, %s120
      %p132 = scmp.eq.s32.totalorder %s21, 3
      %p133 = por %p131, %p132
      %p135 = scmp.ne.s32.totalorder %s120, %s134
      %p136 = scmp.eq.s32.totalorder %s21, 0
      %p137 = por %p135, %p136
      %s138 = ssub.s32 %s22, %s34
      %p139 = scmp.eq.s32.totalorder %s138, 0
      %s141 = sadd.s32 %s140, 1
      %s142 = scalar_select %p139, %s140, %s141
      %p145 = pneg %p139
      %p146 = scmp.eq.s32.totalorder %s15, 3
      %p147 = por %p145, %p146
      %p148 = scmp.ne.s32.totalorder %s140, %s143
      %p149 = scmp.eq.s32.totalorder %s15, 0
      %p150 = por %p148, %p149
      %p151 = scmp.ne.s32.totalorder %s140, %s143
      %p152 = scmp.eq.s32.totalorder %s20, 3
      %p153 = por %p151, %p152
      %p154 = scmp.ne.s32.totalorder %s143, %s144
      %p155 = scmp.eq.s32.totalorder %s20, 0
      %p156 = por %p154, %p155
      %p157 = scmp.ne.s32.totalorder %s143, %s144
      %p158 = scmp.eq.s32.totalorder %s21, 3
      %p159 = por %p157, %p158
      %p161 = scmp.ne.s32.totalorder %s144, %s160
      %p162 = scmp.eq.s32.totalorder %s21, 0
      %p163 = por %p161, %p162
      %s164 = ssub.s32 %s23, %s30
      %s165 = ssub.s32 %s22, %s34
      %s166 = sor.u32 %s164, %s165
      %p167 = scmp.eq.s32.totalorder %s166, 0
      %s169 = sadd.s32 %s168, 1
      %s170 = scalar_select %p167, %s168, %s169
      %p173 = pneg %p167
      %p174 = scmp.eq.s32.totalorder %s15, 3
      %p175 = por %p173, %p174
      %p176 = scmp.ne.s32.totalorder %s168, %s171
      %p177 = scmp.eq.s32.totalorder %s15, 0
      %p178 = por %p176, %p177
      %p179 = scmp.ne.s32.totalorder %s168, %s171
      %p180 = scmp.eq.s32.totalorder %s20, 3
      %p181 = por %p179, %p180
      %p182 = scmp.ne.s32.totalorder %s171, %s172
      %p183 = scmp.eq.s32.totalorder %s20, 0
      %p184 = por %p182, %p183
      %p185 = scmp.ne.s32.totalorder %s171, %s172
      %p186 = scmp.eq.s32.totalorder %s21, 3
      %p187 = por %p185, %p186
      %p189 = scmp.ne.s32.totalorder %s172, %s188
      %p190 = scmp.eq.s32.totalorder %s21, 0
      %p191 = por %p189, %p190
      %p192 = scmp.le.s32.totalorder 1, %s15
      %p193 = scmp.lt.s32.totalorder %s15, 5
      %p194 = pnand %p192, %p193
      %p195 = pneg %p194
      // Predicated region
      $region9: #{ogb_gat_forward.9} parent=5 // pred_check
        _
      $region10: #{ogb_gat_forward.9} parent=5 // pred_check_branch
        %197 = sbr.rel (%p194) target = $region12
      $region11: #{ogb_gat_forward.9} parent=5 // pred_region
        %s198 = ssub.s32 %s15, 1
        // Predicated region
        $region13: #{ogb_gat_forward.9} parent=11 // pred_check
          %p199 = pneg %p109
        $region14: #{ogb_gat_forward.9} parent=11 // pred_check_branch
          %201 = sbr.rel (%p199) target = $region16
        $region15: #{ogb_gat_forward.9} parent=11 // pred_region
          %s202 = smul.u32 2, %s24
          %p203 = scmp.lt.s32.totalorder %s202, 1
          %s204 = scalar_select %p203, %s202, 1
          %s205 = smul.addr %s204, 4
          %s206 = scalar_lea.vmem %s2, %s205
          %s207 = smul.u32 2, %s24
        $region16: #{ogb_gat_forward.9} parent=11 // pred_fallthru
          _
        // Predicated region
        $region17: #{ogb_gat_forward.9} parent=11 // pred_check
          %p208 = pneg %p130
        $region18: #{ogb_gat_forward.9} parent=11 // pred_check_branch
          %210 = sbr.rel (%p208) target = $region20
        $region19: #{ogb_gat_forward.9} parent=11 // pred_region
          _
        $region20: #{ogb_gat_forward.9} parent=11 // pred_fallthru
          _
      $region12: #{ogb_gat_forward.9} parent=5 // pred_fallthru
        _
      %p211 = scmp.lt.s32.totalorder %s15, 4
      // Predicated region
      $region21: #{ogb_gat_forward.9} parent=5 // pred_check
        %p212 = pneg %p211
      $region22: #{ogb_gat_forward.9} parent=5 // pred_check_branch
        %214 = sbr.rel (%p212) target = $region24
      $region23: #{ogb_gat_forward.9} parent=5 // pred_region
        // Predicated region
        $region25: #{ogb_gat_forward.9} parent=23 // pred_check
          %p215 = pneg %p47
        $region26: #{ogb_gat_forward.9} parent=23 // pred_check_branch
          %217 = sbr.rel (%p215) target = $region28
        $region27: #{ogb_gat_forward.9} parent=23 // pred_region
          %p218 = scmp.lt.s32.totalorder %s23, 7
          %s219 = scalar_select %p218, %s23, 7
          %s220 = smul.addr %s219, 2
          %s221 = smul.addr %s220, 4
          %s222 = scalar_lea.vmem %s0, %s221
        $region28: #{ogb_gat_forward.9} parent=23 // pred_fallthru
          _
        // Predicated region
        $region29: #{ogb_gat_forward.9} parent=23 // pred_check
          %p223 = pneg %p77
        $region30: #{ogb_gat_forward.9} parent=23 // pred_check_branch
          %225 = sbr.rel (%p223) target = $region32
        $region31: #{ogb_gat_forward.9} parent=23 // pred_region
          %s226 = sadd.s32 %s23, 4
          %s227 = smul.u32 2, %s22
          %p228 = scmp.lt.s32.totalorder %s226, 7
          %s229 = scalar_select %p228, %s226, 7
          %p230 = scmp.lt.s32.totalorder %s227, 1
          %s231 = scalar_select %p230, %s227, 1
          %s232 = smul.addr %s229, 2
          %s233 = sadd.s32 %s231, %s232
          %s234 = smul.addr %s233, 4
          %s235 = scalar_lea.vmem %s1, %s234
          %s236 = sadd.s32 %s23, 4
          %s237 = smul.u32 2, %s22
        $region32: #{ogb_gat_forward.9} parent=23 // pred_fallthru
          _
      $region24: #{ogb_gat_forward.9} parent=5 // pred_fallthru
        _
      %p238 = scmp.le.s32.totalorder 1, %s15
      %p239 = scmp.lt.s32.totalorder %s15, 5
      %p240 = pnand %p238, %p239
      %p241 = pneg %p240
      // Predicated region
      $region33: #{ogb_gat_forward.9} parent=5 // pred_check
        _
      $region34: #{ogb_gat_forward.9} parent=5 // pred_check_branch
        %243 = sbr.rel (%p240) target = $region36
      $region35: #{ogb_gat_forward.9} parent=5 // pred_region
        %s244 = ssub.s32 %s15, 1
        %p245 = scmp.lt.s32.totalorder %s25, 7
        %s246 = scalar_select %p245, %s25, 7
        %s247 = smul.addr %s246, 2
        %s248 = smul.addr %s247, 4
        %s249 = scalar_lea.vmem %s0, %s248
        %p250 = pneg %p53
        %p251 = pneg %p50
        %s252 = sadd.s32 %s25, 4
        %s253 = smul.u32 2, %s24
        %p254 = scmp.lt.s32.totalorder %s252, 7
        %s255 = scalar_select %p254, %s252, 7
        %p256 = scmp.lt.s32.totalorder %s253, 1
        %s257 = scalar_select %p256, %s253, 1
        %s258 = smul.addr %s255, 2
        %s259 = sadd.s32 %s257, %s258
        %s260 = smul.addr %s259, 4
        %s261 = scalar_lea.vmem %s1, %s260
        %p262 = pneg %p83
        %p263 = pneg %p80
        %s264 = smul.u32 2, %s24
        %p265 = scmp.lt.s32.totalorder %s264, 1
        %s266 = scalar_select %p265, %s264, 1
        %s267 = smul.addr %s266, 4
        %s268 = scalar_lea.vmem %s2, %s267
        %p269 = pneg %p109
        %p270 = pneg %p106
        %p271 = pneg %p130
        %p272 = pneg %p127
        %p273 = pneg %p156
        %p274 = pneg %p153
        %s275 = smul.u32 2, %s24
        %p276 = scmp.lt.s32.totalorder %s275, 1
        %s277 = scalar_select %p276, %s275, 1
        %s278 = smul.addr %s277, 8
        %s279 = scalar_lea.vmem %s4, %s278
        %p280 = pneg %p184
        %p281 = pneg %p181
        %s282 = sand.u32 %s171, 1
        %s283 = scalar_lea.sflag [#allocation3], %s282
        %s284 = sand.u32 %s171, 1
        %s285 = smul.addr %s284, 16
        %s286 = scalar_lea.vmem [#allocation2], %s285
        %p287 = scmp.lt.s32.totalorder %s25, 7
        %s288 = scalar_select %p287, %s25, 7
        %s289 = smul.addr %s288, 2
        %s290 = smul.addr %s289, 4
        %s291 = scalar_lea.vmem %s0, %s290
        %s292 = sadd.s32 %s25, 4
        %s293 = smul.u32 2, %s24
        %p294 = scmp.lt.s32.totalorder %s292, 7
        %s295 = scalar_select %p294, %s292, 7
        %p296 = scmp.lt.s32.totalorder %s293, 1
        %s297 = scalar_select %p296, %s293, 1
        %s298 = smul.addr %s295, 2
        %s299 = sadd.s32 %s297, %s298
        %s300 = smul.addr %s299, 4
        %s301 = scalar_lea.vmem %s1, %s300
        %s302 = sadd.s32 %s25, 4
        %s303 = smul.u32 2, %s24
        %s304 = smul.u32 2, %s24
        %p305 = scmp.lt.s32.totalorder %s304, 1
        %s306 = scalar_select %p305, %s304, 1
        %s307 = smul.addr %s306, 4
        %s308 = scalar_lea.vmem %s2, %s307
        %s309 = smul.u32 2, %s24
        %s310 = smul.u32 2, %s24
        %p311 = scmp.lt.s32.totalorder %s310, 1
        %s312 = scalar_select %p311, %s310, 1
        %s313 = smul.addr %s312, 8
        %s314 = scalar_lea.vmem %s4, %s313
        %s315 = smul.u32 2, %s24
        %s316 = smul.u32 2, %s24
        %s318 = smul.u32 %s24, 16
        %v319 = vld [vmem:[%s291] sm:$0xf]
        %v320 = vld [vmem:[%s291 + $0x4] sm:$0xf]
        %s321 = sshra.s32 %s318, 3
        %s322 = sand.u32 %s318, 7
        %s323 = smul.addr %s321, 4
        %s324 = scalar_lea.vmem %s291, %s323
        %v325 = vld [vmem:[%s324] sm:$0xf]
        %v326 = vld [vmem:[%s324 + $0x4] sm:$0xf]
        %v327 = vunpack.c.l.bf16 %v319
        %v328 = vunpack.c.l.bf16 %v320
        %v329 = vunpack.c.l.bf16 %v325
        %v330 = vunpack.c.l.bf16 %v326
        %333 = vrot.lane.b32.xlu0 %v327, 124
        %v334 = vpop.permute.xlu0 %333
        %335 = vrot.lane.b32.xlu0 %v328, 124
        %v336 = vpop.permute.xlu0 %335
        %339 = vxpose.xlu0.b32.start [1/16] %v334, 128
        %340 = vxpose.xlu0.b32.cont [2/16] %v336, 128
        %341 = vxpose.xlu0.b32.cont [3/16] 0.0, 128
        %342 = vxpose.xlu0.b32.cont [4/16] 0.0, 128
        %343 = vxpose.xlu0.b32.cont [5/16] 0.0, 128
        %344 = vxpose.xlu0.b32.cont [6/16] 0.0, 128
        %345 = vxpose.xlu0.b32.cont [7/16] 0.0, 128
        %346 = vxpose.xlu0.b32.cont [8/16] 0.0, 128
        %347 = vxpose.xlu0.b32.cont [9/16] 0.0, 128
        %348 = vxpose.xlu0.b32.cont [10/16] 0.0, 128
        %349 = vxpose.xlu0.b32.cont [11/16] 0.0, 128
        %350 = vxpose.xlu0.b32.cont [12/16] 0.0, 128
        %351 = vxpose.xlu0.b32.cont [13/16] 0.0, 128
        %352 = vxpose.xlu0.b32.cont [14/16] 0.0, 128
        %353 = vxpose.xlu0.b32.cont [15/16] 0.0, 128
        %354 = vxpose.xlu0.b32.end [16/16] 0.0, 128
        %v355 = vpop.trf.xlu0
        %v356 = vpop.trf.xlu0
        %v357 = vpop.trf.xlu0
        %v358 = vpop.trf.xlu0
        %v359 = vpop.trf.xlu0
        %v360 = vpop.trf.xlu0
        %v361 = vpop.trf.xlu0
        %v362 = vpop.trf.xlu0
        %v363 = vpop.trf.xlu0
        %v364 = vpop.trf.xlu0
        %v365 = vpop.trf.xlu0
        %v366 = vpop.trf.xlu0
        %v367 = vpop.trf.xlu0
        %v368 = vpop.trf.xlu0
        %v369 = vpop.trf.xlu0
        %v370 = vpop.trf.xlu0
        %372 = vset.pattern.permute.xlu0 5
        %373 = vperm.xlu0 %372, %v329
        %v374 = vpop.permute.xlu0 %373
        %377 = vset.pattern.permute.xlu0 5
        %378 = vperm.xlu0 %377, %v330
        %v379 = vpop.permute.xlu0 %378
        %v381 = vlaneseq
        %v382 = vshrl.u32 %v381, 7
        %v383 = vsub.s32 0, %v382
        %v384 = vrot.slane %v355, %v383
        %v385 = vadd.f32 %v374, %v384
        %v386 = vadd.f32 %v379, %v384
        %vm387 = vcmp.gt.f32.partialorder %v385, 0.0
        %vm388 = vcmp.gt.f32.partialorder %v386, 0.0
        %v389 = vmul.f32 %v385, 0.2
        %v390 = vmul.f32 %v386, 0.2
        %v391 = vsel %vm387, %v385, %v389
        %v392 = vsel %vm388, %v386, %v390
        %v393 = vld [vmem:[%s308] sm:$0xf]
        %v394 = vld [vmem:[%s308 + $0x4] sm:$0xf]
        %v395 = vunpack.c.l.bf16 %v393
        %v396 = vunpack.c.l.bf16 %v394
        %v397 = vadd.f32 %v391, %v395
        %v398 = vadd.f32 %v392, %v396
        %vm399 = vcmask 130048
        %v400 = vsel %vm399, %v397, -inf
        %401 = vmax.xlane.f32.xlu0 %v400
        %v402 = vpop.xlane.xlu0 %401
        %v403 = vsel %vm399, %v398, -inf
        %404 = vmax.xlane.f32.xlu0 %v403
        %v405 = vpop.xlane.xlu0 %404
        %v406 = vsub.f32 %v397, %v402
        %v407 = vsub.f32 %v398, %v405
        %v408 = vmul.f32 %v406, 1.442695
        %v409 = vpow.pop %v408
        %v410 = vmul.f32 %v407, 1.442695
        %v411 = vpow.pop %v410
        %v412 = vsel %vm399, %v409, 0.0
        %413 = vadd.xlane.f32.xlu0 %v412
        %v414 = vpop.xlane.xlu0 %413
        %v415 = vsel %vm399, %v411, 0.0
        %416 = vadd.xlane.f32.xlu0 %v415
        %v417 = vpop.xlane.xlu0 %416
        %v418 = vrcp.pop %v414
        %v419 = vmul.f32 %v409, %v418
        %v420 = vrcp.pop %v417
        %v421 = vmul.f32 %v411, %v420
        %422 = vst.msk [vmem:[%s286] sm:$0xff] %vm399, %v419
        %423 = vst.msk [vmem:[%s286 + $0x8] sm:$0xff] %vm399, %v421
        %v424 = vpack.c.bf16 %v421, %v419
        %v427 = vunpack.c.l.b16 %v319
        %v428 = vunpack.c.l.b16 %v320
        %v429 = vpack.c.b16 %v428, %v427
        %v432 = vsel %vm399, %v424, 0
        %434 = vmatprep.subr.bf16.mxu0 0
        %435 = vmatpush1.bf16.msra.mxu0 %v429
        %436 = vmatprep.subr.bf16.mxu0 0
        %437 = vmatpush1.bf16.msra.mxu0 0
        %438 = vmatprep.subr.bf16.mxu0 0
        %439 = vmatpush1.bf16.msra.mxu0 0
        %440 = vmatprep.subr.bf16.mxu0 0
        %441 = vmatpush1.bf16.msra.mxu0 0
        %442 = vmatprep.subr.bf16.mxu0 0
        %443 = vmatpush1.bf16.msra.mxu0 0
        %444 = vmatprep.subr.bf16.mxu0 0
        %445 = vmatpush1.bf16.msra.mxu0 0
        %446 = vmatprep.subr.bf16.mxu0 0
        %447 = vmatpush1.bf16.msra.mxu0 0
        %448 = vmatprep.subr.bf16.mxu0 0
        %449 = vmatpush1.bf16.msra.mxu0 0
        %450 = vmatprep.subr.bf16.mxu0 0
        %451 = vmatpush1.bf16.msra.mxu0 0
        %452 = vmatprep.subr.bf16.mxu0 0
        %453 = vmatpush1.bf16.msra.mxu0 0
        %454 = vmatprep.subr.bf16.mxu0 0
        %455 = vmatpush1.bf16.msra.mxu0 0
        %456 = vmatprep.subr.bf16.mxu0 0
        %457 = vmatpush1.bf16.msra.mxu0 0
        %458 = vmatprep.subr.bf16.mxu0 0
        %459 = vmatpush1.bf16.msra.mxu0 0
        %460 = vmatprep.subr.bf16.mxu0 0
        %461 = vmatpush1.bf16.msra.mxu0 0
        %462 = vmatprep.subr.bf16.mxu0 0
        %463 = vmatpush1.bf16.msra.mxu0 0
        %464 = vmatprep.subr.bf16.mxu0 0
        %465 = vmatpush1.bf16.msra.mxu0 0
        %466 = vmatprep.mubr.bf16.mxu0 0
        %467 = vmatmul.mubr.bf16.gmra.mrb[0].mxu0 %v432
        %v468 = vpop.f32.mrb[0].mxu0
        %v469 = vadd.f32 0.0, %v468
        %v470 = vpop.f32.mrb[0].mxu0
        %v471 = vpop.f32.mrb[0].mxu0
        %v472 = vadd.f32 0.0, %v471
        %v473 = vpop.f32.mrb[0].mxu0
        %474 = vdwg.mxu0
        %v475 = vld [vmem:[%s301] sm:$0xf]
        %v476 = vld [vmem:[%s301 + $0x4] sm:$0xf]
        %v477 = vunpack.c.l.bf16 %v475
        %v478 = vunpack.c.l.bf16 %v476
        %v479 = vadd.f32 %v469, %v477
        %v480 = vadd.f32 %v472, %v478
        %p481 = scmp.eq.s32.totalorder %s25, 0
        // Predicated region
        $region37: #{ogb_gat_forward.9} parent=35 // pred_check
          %p482 = pneg %p481
        $region38: #{ogb_gat_forward.9} parent=35 // pred_check_branch
          %484 = sbr.rel (%p482) target = $region40
        $region39: #{ogb_gat_forward.9} parent=35 // pred_region
          %vm485 = vcmask 31744
          %486 = vst.msk [vmem:[%s314] sm:$0xff] %vm485, 0.0
          %487 = vst.msk [vmem:[%s314 + $0x8] sm:$0xff] %vm485, 0.0
        $region40: #{ogb_gat_forward.9} parent=35 // pred_fallthru
          _
        %v488 = vld [vmem:[%s314] sm:$0xff]
        %v489 = vld [vmem:[%s314 + $0x8] sm:$0xff]
        %v490 = vadd.f32 %v488, %v479
        %v491 = vadd.f32 %v489, %v480
        %vm492 = vcmask 31744
        %493 = vst.msk [vmem:[%s314] sm:$0xff] %vm492, %v490
        %494 = vst.msk [vmem:[%s314 + $0x8] sm:$0xff] %vm492, %v491
        %p495 = scmp.eq.s32.totalorder %s25, 3
        // Predicated region
        $region41: #{ogb_gat_forward.9} parent=35 // pred_check
          %p496 = pneg %p495
        $region42: #{ogb_gat_forward.9} parent=35 // pred_check_branch
          %498 = sbr.rel (%p496) target = $region44
        $region43: #{ogb_gat_forward.9} parent=35 // pred_region
          %v499 = vld [vmem:[%s314] sm:$0xff]
          %v500 = vld [vmem:[%s314 + $0x8] sm:$0xff]
          %v501 = vmul.f32 %v499, 0.25
          %v502 = vmul.f32 %v500, 0.25
          %v503 = vld [vmem:[%s3] sm:$0x1]
          %v505 = vlaneseq
          %v506 = vshrl.u32 %v505, 7
          %v507 = vsub.s32 0, %v506
          %v508 = vrot.slane %v503, %v507
          %v510 = vadd.f32 %v501, %v508
          %v511 = vadd.f32 %v502, %v508
          %512 = vst.msk [vmem:[%s314] sm:$0xff] %vm492, %v510
          %513 = vst.msk [vmem:[%s314 + $0x8] sm:$0xff] %vm492, %v511
        $region44: #{ogb_gat_forward.9} parent=35 // pred_fallthru
          _
        %s514 = smul.u32 2, %s24
        %p515 = scmp.lt.s32.totalorder %s514, 1
        %s516 = scalar_select %p515, %s514, 1
        %s517 = smul.addr %s516, 8
        %s518 = scalar_lea.vmem %s4, %s517
        %s519 = sand.u32 %s171, 1
        %s520 = scalar_lea.sflag [#allocation3], %s519
        %s521 = sand.u32 %s171, 1
        %s522 = smul.addr %s521, 16
        %s523 = scalar_lea.vmem [#allocation2], %s522
        // Predicated region
        $region45: #{ogb_gat_forward.9} parent=35 // pred_check
          %p524 = pneg %p153
        $region46: #{ogb_gat_forward.9} parent=35 // pred_check_branch
          %526 = sbr.rel (%p524) target = $region48
        $region47: #{ogb_gat_forward.9} parent=35 // pred_region
          %s527 = smul.u32 2, %s24
        $region48: #{ogb_gat_forward.9} parent=35 // pred_fallthru
          _
        // Predicated region
        $region49: #{ogb_gat_forward.9} parent=35 // pred_check
          %p528 = pneg %p181
        $region50: #{ogb_gat_forward.9} parent=35 // pred_check_branch
          %530 = sbr.rel (%p528) target = $region52
        $region51: #{ogb_gat_forward.9} parent=35 // pred_region
          %s531 = smul.u32 2, %s24
          %s533 = ssub.s32 256, 256
          %534 = vsyncadd %s520, %s533
          %s535 = smul.addr %s25, 2
          %s536 = sadd.s32 %s531, %s535
          %s537 = smul.addr %s536, 128
          %s538 = scalar_lea.hbm %s5, %s537
          %s539 = sshll.u32 %s523, 4
          %s540 = int_to_ptr.vmem [resolvable:$true] %s539
          %545 = dma.vmem_to_hbm [thread:$0]  %s540, 256, %s538, %s520, 128, 128, 8
        $region52: #{ogb_gat_forward.9} parent=35 // pred_fallthru
          _
        // Predicated region
        $region53: #{ogb_gat_forward.9} parent=35 // pred_check
          %p546 = pneg %p153
        $region54: #{ogb_gat_forward.9} parent=35 // pred_check_branch
          %548 = sbr.rel (%p546) target = $region56
        $region55: #{ogb_gat_forward.9} parent=35 // pred_region
          %s549 = smul.u32 2, %s24
          %p550 = scmp.lt.s32.totalorder %s549, 1
          %s551 = scalar_select %p550, %s549, 1
          %s552 = smul.addr %s551, 8
          %s553 = scalar_lea.vmem %s4, %s552
        $region56: #{ogb_gat_forward.9} parent=35 // pred_fallthru
          _
      $region36: #{ogb_gat_forward.9} parent=5 // pred_fallthru
        _
      %p554 = scmp.le.s32.totalorder 2, %s15
      // Predicated region
      $region57: #{ogb_gat_forward.9} parent=5 // pred_check
        %p555 = pneg %p554
      $region58: #{ogb_gat_forward.9} parent=5 // pred_check_branch
        %557 = sbr.rel (%p555) target = $region60
      $region59: #{ogb_gat_forward.9} parent=5 // pred_region
        %s558 = ssub.s32 %s15, 2
        // Predicated region
        $region61: #{ogb_gat_forward.9} parent=59 // pred_check
          %p559 = pneg %p187
        $region62: #{ogb_gat_forward.9} parent=59 // pred_check_branch
          %561 = sbr.rel (%p559) target = $region64
        $region63: #{ogb_gat_forward.9} parent=59 // pred_region
          %s562 = sand.u32 %s172, 1
          %s563 = scalar_lea.sflag [#allocation3], %s562
          %s564 = sand.u32 %s172, 1
          %s565 = smul.addr %s564, 16
          %s566 = scalar_lea.vmem [#allocation2], %s565
          %567 = dma.done %s563, 256
        $region64: #{ogb_gat_forward.9} parent=59 // pred_fallthru
          _
      $region60: #{ogb_gat_forward.9} parent=5 // pred_fallthru
        _
    $region6: #{ogb_gat_forward.9} parent=1 // loop_footer
      %s19 = sadd.s32 1, %s15
    $region7: #{ogb_gat_forward.9} parent=1 // loop_footer_branch
      %14 = sbr.rel target = $region3
    $region8: #{ogb_gat_forward.9} parent=1 // loop_exit
      _
    %568 = vsyncpa [#allocation3], 1
    %s569 = scalar_lea.sflag [#allocation3], 1
    %570 = vsyncpa %s569, 1

</llo_original>
